<compile_context>
chip_gen: v5e
topology: v5e:2x2
jax: 0.10.0
libtpu: 0.0.40
codegen_flags: <defaults>
</compile_context>

<pallas_src>
import functools
import math

import jax
import jax.numpy as jnp
from jax import lax
from jax.experimental import pallas as pl
from jax.experimental.pallas import tpu as pltpu


# ------------------------------ small helpers ------------------------------

def _round_up(x, m):
    return (x + m - 1) // m * m


def _fit(dim, pref):
    """Return (padded_dim, tile): full-array block for small dims, otherwise
    tile `pref` with the dim padded up to a multiple of it."""
    if dim <= pref:
        return dim, dim
    return _round_up(dim, pref), pref


def _pad2d(x, rows, cols):
    r, c = x.shape
    if r == rows and c == cols:
        return x
    return jnp.pad(x, ((0, rows - r), (0, cols - c)))


# --------------------------- tiled linear (matmul) --------------------------

def _matmul_kernel(x_ref, w_ref, o_ref, acc_ref):
    @pl.when(pl.program_id(2) == 0)
    def _():
        acc_ref[...] = jnp.zeros(acc_ref.shape, acc_ref.dtype)

    acc_ref[...] += jnp.dot(x_ref[...], w_ref[...],
                            preferred_element_type=jnp.float32)

    @pl.when(pl.program_id(2) == pl.num_programs(2) - 1)
    def _():
        o_ref[...] = acc_ref[...].astype(o_ref.dtype)


def _matmul_residual_kernel(x_ref, w_ref, r_ref, o_ref, acc_ref):
    @pl.when(pl.program_id(2) == 0)
    def _():
        acc_ref[...] = jnp.zeros(acc_ref.shape, acc_ref.dtype)

    acc_ref[...] += jnp.dot(x_ref[...], w_ref[...],
                            preferred_element_type=jnp.float32)

    @pl.when(pl.program_id(2) == pl.num_programs(2) - 1)
    def _():
        # fused residual add in the epilogue (saves one HBM pass over x)
        o_ref[...] = (acc_ref[...] + r_ref[...].astype(jnp.float32)
                      ).astype(o_ref.dtype)


def linear(x, w, residual=None, out_dtype=jnp.bfloat16, tm=256, tn=256, tk=512):
    """x:[M,K] @ w:[K,N] (+ residual:[M,N]) with K-accumulation in f32 VMEM."""
    M, K = x.shape
    _, N = w.shape
    Mp, tm = _fit(M, tm)
    Np, tn = _fit(N, tn)
    Kp, tk = _fit(K, tk)
    xp = _pad2d(x, Mp, Kp)
    wp = _pad2d(w, Kp, Np)

    grid = (Mp // tm, Np // tn, Kp // tk)
    x_spec = pl.BlockSpec((tm, tk), lambda i, j, k: (i, k))
    w_spec = pl.BlockSpec((tk, tn), lambda i, j, k: (k, j))
    o_spec = pl.BlockSpec((tm, tn), lambda i, j, k: (i, j))
    scratch = [pltpu.VMEM((tm, tn), jnp.float32)]
    cparams = pltpu.CompilerParams(
        dimension_semantics=("parallel", "parallel", "arbitrary"))

    if residual is None:
        out = pl.pallas_call(
            _matmul_kernel,
            out_shape=jax.ShapeDtypeStruct((Mp, Np), out_dtype),
            grid=grid,
            in_specs=[x_spec, w_spec],
            out_specs=o_spec,
            scratch_shapes=scratch,
            compiler_params=cparams,
        )(xp, wp)
    else:
        rp = _pad2d(residual, Mp, Np)
        out = pl.pallas_call(
            _matmul_residual_kernel,
            out_shape=jax.ShapeDtypeStruct((Mp, Np), out_dtype),
            grid=grid,
            in_specs=[x_spec, w_spec,
                      pl.BlockSpec((tm, tn), lambda i, j, k: (i, j))],
            out_specs=o_spec,
            scratch_shapes=scratch,
            compiler_params=cparams,
        )(xp, wp, rp)

    if (Mp, Np) != (M, N):
        out = out[:M, :N]
    return out


# --------------------------------- RMSNorm ---------------------------------

def _rmsnorm_kernel(x_ref, w_ref, o_ref, *, eps):
    x = x_ref[...].astype(jnp.float32)
    ms = jnp.mean(x * x, axis=-1, keepdims=True)
    o_ref[...] = (x * lax.rsqrt(ms + eps)
                  * w_ref[...].astype(jnp.float32)).astype(o_ref.dtype)


def rmsnorm(x, w, eps=1e-5, out_dtype=jnp.bfloat16, tm=256):
    """Row-tiled RMSNorm; weight block (1,H) stays resident."""
    T, H = x.shape
    Tp, tm = _fit(T, tm)
    xp = _pad2d(x, Tp, H)
    out = pl.pallas_call(
        functools.partial(_rmsnorm_kernel, eps=eps),
        out_shape=jax.ShapeDtypeStruct((Tp, H), out_dtype),
        grid=(Tp // tm,),
        in_specs=[pl.BlockSpec((tm, H), lambda i: (i, 0)),
                  pl.BlockSpec((1, H), lambda i: (0, 0))],
        out_specs=pl.BlockSpec((tm, H), lambda i: (i, 0)),
        compiler_params=pltpu.CompilerParams(dimension_semantics=("parallel",)),
    )(xp, w.reshape(1, H))
    return out[:T] if Tp != T else out


# ----------------------- fused SwiGLU FFN (F-tiled) -------------------------

def _ffn_kernel(x_ref, w1_ref, w3_ref, w2_ref, r_ref, o_ref, acc_ref):
    @pl.when(pl.program_id(1) == 0)
    def _():
        acc_ref[...] = jnp.zeros(acc_ref.shape, acc_ref.dtype)

    x = x_ref[...]                                                  # [tm, H]
    h1 = jnp.dot(x, w1_ref[...], preferred_element_type=jnp.float32)
    h3 = jnp.dot(x, w3_ref[...], preferred_element_type=jnp.float32)
    h = (h1 * jax.nn.sigmoid(h1)) * h3                              # SiLU(F1)*F3
    acc_ref[...] += jnp.dot(h.astype(w2_ref.dtype), w2_ref[...],
                            preferred_element_type=jnp.float32)

    @pl.when(pl.program_id(1) == pl.num_programs(1) - 1)
    def _():
        # fused residual add (x + FFN(norm(x)))
        o_ref[...] = (acc_ref[...] + r_ref[...].astype(jnp.float32)
                      ).astype(o_ref.dtype)


def feed_forward(x, w1, w3, w2, residual, out_dtype=jnp.bfloat16, tm=256, tf=256):
    """x:[T,H]; w1,w3:[H,F]; w2:[F,H]. Tiled over rows and over F; the three
    weight tiles are streamed from HBM while a [tm,H] f32 accumulator stays
    resident in VMEM."""
    T, H = x.shape
    F = w1.shape[1]
    Tp, tm = _fit(T, tm)
    Fp, tf = _fit(F, tf)
    xp = _pad2d(x, Tp, H)
    rp = _pad2d(residual, Tp, H)
    w1p = _pad2d(w1, H, Fp)
    w3p = _pad2d(w3, H, Fp)
    w2p = _pad2d(w2, Fp, H)

    out = pl.pallas_call(
        _ffn_kernel,
        out_shape=jax.ShapeDtypeStruct((Tp, H), out_dtype),
        grid=(Tp // tm, Fp // tf),
        in_specs=[pl.BlockSpec((tm, H), lambda i, f: (i, 0)),
                  pl.BlockSpec((H, tf), lambda i, f: (0, f)),
                  pl.BlockSpec((H, tf), lambda i, f: (0, f)),
                  pl.BlockSpec((tf, H), lambda i, f: (f, 0)),
                  pl.BlockSpec((tm, H), lambda i, f: (i, 0))],
        out_specs=pl.BlockSpec((tm, H), lambda i, f: (i, 0)),
        scratch_shapes=[pltpu.VMEM((tm, H), jnp.float32)],
        compiler_params=pltpu.CompilerParams(
            dimension_semantics=("parallel", "arbitrary")),
    )(xp, w1p, w3p, w2p, rp)
    return out[:T] if Tp != T else out


# -------------------------- RoPE (hoisted, tiled) ---------------------------

def _rope_kernel(q_ref, k_ref, cos_ref, sin_ref, rot_ref, qo_ref, ko_ref, *, scale):
    cos = cos_ref[...]
    sin = sin_ref[...]
    rot = rot_ref[...]                       # DxD rotate_half matrix (constant)

    def rope(x):
        xf = x.astype(jnp.float32)
        # rotate_half(x) == x @ rot  (tiny MXU matmul; no cross-lane shuffles)
        return xf * cos + jnp.dot(xf, rot, preferred_element_type=jnp.float32) * sin

    qo_ref[0] = (rope(q_ref[0]) * scale).astype(qo_ref.dtype)   # fold 1/sqrt(D) here
    ko_ref[0] = rope(k_ref[0]).astype(ko_ref.dtype)


def apply_rope(q, k, cos, sin, rot, scale, ts=256):
    """q,k:[B*nH,S,D] -> RoPE'd (q pre-scaled by 1/sqrt(D)), bf16 outputs."""
    BH, S, D = q.shape
    ts = min(ts, S)
    if S % ts:
        ts = S
    qk_spec = pl.BlockSpec((1, ts, D), lambda b, s: (b, s, 0))
    cs_spec = pl.BlockSpec((ts, D), lambda b, s: (s, 0))
    rot_spec = pl.BlockSpec((D, D), lambda b, s: (0, 0))
    return pl.pallas_call(
        functools.partial(_rope_kernel, scale=scale),
        out_shape=(jax.ShapeDtypeStruct((BH, S, D), jnp.bfloat16),
                   jax.ShapeDtypeStruct((BH, S, D), jnp.bfloat16)),
        grid=(BH, S // ts),
        in_specs=[qk_spec, qk_spec, cs_spec, cs_spec, rot_spec],
        out_specs=(qk_spec, qk_spec),
        compiler_params=pltpu.CompilerParams(
            dimension_semantics=("parallel", "parallel")),
    )(q, k, cos, sin, rot)


# ------------------- flash-style causal attention kernel --------------------

def _flash_attn_kernel(q_ref, k_ref, v_ref, o_ref, m_ref, l_ref, acc_ref, *, tq, tk):
    qi = pl.program_id(1)
    ki = pl.program_id(2)

    @pl.when(ki == 0)
    def _():
        m_ref[...] = jnp.full(m_ref.shape, -jnp.inf, jnp.float32)
        l_ref[...] = jnp.zeros(l_ref.shape, jnp.float32)
        acc_ref[...] = jnp.zeros(acc_ref.shape, jnp.float32)

    q_start = qi * tq
    k_start = ki * tk

    # Causal block skipping: kv tiles entirely above the diagonal do no work.
    @pl.when(k_start <= q_start + tq - 1)
    def _():
        q = q_ref[0]                         # [tq, D] bf16 (RoPE'd, pre-scaled)
        k = k_ref[0]                         # [tk, D]
        v = v_ref[0]                         # [tk, D]
        # q @ k^T via dot_general contracting last dims (no XLU transpose of k)
        s = lax.dot_general(q, k, (((1,), (1,)), ((), ())),
                            preferred_element_type=jnp.float32)   # [tq, tk]
        row = q_start + lax.broadcasted_iota(jnp.int32, (tq, tk), 0)
        col = k_start + lax.broadcasted_iota(jnp.int32, (tq, tk), 1)
        s = jnp.where(col <= row, s, -jnp.inf)

        m_prev = m_ref[...]
        m_new = jnp.maximum(m_prev, jnp.max(s, axis=-1, keepdims=True))
        alpha = jnp.exp(m_prev - m_new)
        p = jnp.exp(s - m_new)
        l_ref[...] = alpha * l_ref[...] + jnp.sum(p, axis=-1, keepdims=True)
        acc_ref[...] = alpha * acc_ref[...] + jnp.dot(
            p.astype(v.dtype), v, preferred_element_type=jnp.float32)
        m_ref[...] = m_new

    @pl.when(ki == pl.num_programs(2) - 1)
    def _():
        inv_l = pl.reciprocal(l_ref[...], approx=True)   # EUP, off the VALU
        o_ref[0] = (acc_ref[...] * inv_l).astype(o_ref.dtype)


def flash_causal_attention(q, k, v, tq=128, tk=128):
    """q,k,v:[B*nH,S,D] -> [B*nH,S,D] (bf16), online-softmax causal attention.
    NOTE: for real models D=128 the (1,tq,D) blocks are lane-dense; tiny demo
    head dims only use the full-array-block escape."""
    BH, S, D = q.shape
    tq = min(tq, S)
    tk = min(tk, S)
    if S % tq:
        tq = S
    if S % tk:
        tk = S
    return pl.pallas_call(
        functools.partial(_flash_attn_kernel, tq=tq, tk=tk),
        out_shape=jax.ShapeDtypeStruct((BH, S, D), jnp.bfloat16),
        grid=(BH, S // tq, S // tk),
        in_specs=[pl.BlockSpec((1, tq, D), lambda b, qi, ki: (b, qi, 0)),
                  pl.BlockSpec((1, tk, D), lambda b, qi, ki: (b, ki, 0)),
                  pl.BlockSpec((1, tk, D), lambda b, qi, ki: (b, ki, 0))],
        out_specs=pl.BlockSpec((1, tq, D), lambda b, qi, ki: (b, qi, 0)),
        scratch_shapes=[pltpu.VMEM((tq, 1), jnp.float32),
                        pltpu.VMEM((tq, 1), jnp.float32),
                        pltpu.VMEM((tq, D), jnp.float32)],
        compiler_params=pltpu.CompilerParams(
            dimension_semantics=("parallel", "parallel", "arbitrary")),
    )(q, k, v)


# ------------------------------- glue / model ------------------------------

def rotary_tables(seq_len, head_dim, base=10000.0, start_pos=0):
    half = head_dim // 2
    inv_freq = 1.0 / (base ** (jnp.arange(half, dtype=jnp.float32) * 2.0 / head_dim))
    pos = jnp.arange(start_pos, start_pos + seq_len, dtype=jnp.float32)
    freqs = pos[:, None] * inv_freq[None, :]                 # [S, D/2]
    cos = jnp.concatenate([jnp.cos(freqs), jnp.cos(freqs)], axis=-1)
    sin = jnp.concatenate([jnp.sin(freqs), jnp.sin(freqs)], axis=-1)
    return cos, sin


def rotate_half_matrix(head_dim):
    """Constant R such that x @ R == rotate_half(x) == concat(-x2, x1)."""
    half = head_dim // 2
    rot = jnp.zeros((head_dim, head_dim), jnp.float32)
    idx = jnp.arange(half)
    rot = rot.at[idx + half, idx].set(-1.0)   # (x@R)[j]      = -x[j+half]
    rot = rot.at[idx, idx + half].set(1.0)    # (x@R)[j+half] =  x[j]
    return rot


def init_params(key, vocab_size, hidden_size, num_heads, n_layer, multiple_of):
    ff = int(hidden_size * 4 * 2 / 3)
    ff = multiple_of * ((ff + multiple_of - 1) // multiple_of)
    keys = jax.random.split(key, 2 + n_layer)

    def dense(k, shape):
        # bf16 weights (half HBM traffic, bf16 MXU rate); f32 accumulation in-kernel.
        return (jax.random.normal(k, shape, jnp.float32) * 0.02).astype(jnp.bfloat16)

    params = {
        'embedding': dense(keys[0], (vocab_size, hidden_size)),
        'head': dense(keys[1], (hidden_size, vocab_size)),   # nn.Linear, pre-transposed [in,out]
        'norm': jnp.ones((hidden_size,), jnp.float32),
        'layers': [],
    }
    for li in range(n_layer):
        lk = jax.random.split(keys[2 + li], 7)
        wq = dense(lk[0], (hidden_size, hidden_size))
        wk = dense(lk[1], (hidden_size, hidden_size))
        wv = dense(lk[2], (hidden_size, hidden_size))
        params['layers'].append({
            'attn_norm': jnp.ones((hidden_size,), jnp.float32),
            'wqkv': jnp.concatenate([wq, wk, wv], axis=1),   # fused q/k/v projection
            'wo': dense(lk[3], (hidden_size, hidden_size)),
            'ffn_norm': jnp.ones((hidden_size,), jnp.float32),
            'w1': dense(lk[4], (hidden_size, ff)),
            'w3': dense(lk[5], (hidden_size, ff)),
            'w2': dense(lk[6], (ff, hidden_size)),
        })
    return params, ff


def decode(params, tokens, num_heads, norm_eps=1e-5, start_pos=0):
    """Model.decode: embedding -> pre-norm transformer blocks -> norm -> head."""
    B, S = tokens.shape
    emb = params['embedding']
    vocab, H = emb.shape
    Dh = H // num_heads
    T = B * S

    # TODO(synk): embedding gather is data-dependent; left to XLA (a Pallas
    #             version would need scalar-prefetch row DMA).
    x = jnp.take(emb, tokens, axis=0).astype(jnp.bfloat16).reshape(T, H)

    cos, sin = rotary_tables(S, Dh, start_pos=start_pos)
    rot = rotate_half_matrix(Dh)
    scale = 1.0 / math.sqrt(Dh)

    def split_heads(t):          # [T, H] -> [B*nH, S, Dh]
        return (t.reshape(B, S, num_heads, Dh)
                 .transpose(0, 2, 1, 3)
                 .reshape(B * num_heads, S, Dh))

    def merge_heads(t):          # [B*nH, S, Dh] -> [T, H]
        return (t.reshape(B, num_heads, S, Dh)
                 .transpose(0, 2, 1, 3)
                 .reshape(T, H))

    for layer in params['layers']:
        # --- attention block (norm_first) ---
        h = rmsnorm(x, layer['attn_norm'], norm_eps)
        qkv = linear(h, layer['wqkv'])                       # fused q/k/v matmul
        q, k, v = jnp.split(qkv, 3, axis=1)
        q, k = apply_rope(split_heads(q), split_heads(k), cos, sin, rot, scale)
        o = flash_causal_attention(q, k, split_heads(v))
        x = linear(merge_heads(o), layer['wo'], residual=x)  # residual fused in epilogue

        # --- feed-forward block (norm_first, SwiGLU) ---
        h = rmsnorm(x, layer['ffn_norm'], norm_eps)
        x = feed_forward(h, layer['w1'], layer['w3'], layer['w2'], residual=x)

    h = rmsnorm(x, params['norm'], norm_eps)
    logits = linear(h, params['head'], out_dtype=jnp.float32)
    return logits.reshape(B, S, vocab)


if __name__ == "__main__":
    vocab_size, hidden_size, num_heads = 64, 32, 4
    n_layer, multiple_of = 2, 32
    B, S = 2, 8

    key = jax.random.PRNGKey(0)
    pkey, tkey = jax.random.split(key)
    params, ff_hidden = init_params(pkey, vocab_size, hidden_size,
                                    num_heads, n_layer, multiple_of)
    tokens = jax.random.randint(tkey, (B, S), 0, vocab_size, dtype=jnp.int32)

    decode_fn = jax.jit(functools.partial(decode, num_heads=num_heads))
    logits = decode_fn(params, tokens)
    jax.block_until_ready(logits)

    assert logits.shape == (B, S, vocab_size), logits.shape
    assert bool(jnp.all(jnp.isfinite(logits)))
    print("KERNEL_OK")
</pallas_src>

<mosaic_0001>
module attributes {stable_mosaic.version = 11 : i64} {
  func.func @_matmul_kernel(%arg0: i32, %arg1: i32, %arg2: i32, %arg3: memref<16x32xbf16, #tpu.memory_space<vmem>>, %arg4: memref<32x96xbf16, #tpu.memory_space<vmem>>, %arg5: memref<16x96xbf16, #tpu.memory_space<vmem>>, %arg6: memref<16x96xf32, #tpu.memory_space<vmem>>) attributes {dimension_semantics = [#tpu.dimension_semantics<parallel>, #tpu.dimension_semantics<parallel>, #tpu.dimension_semantics<arbitrary>], iteration_bounds = array<i64: 1, 1, 1>, scalar_prefetch = 0 : i64, scratch_operands = 1 : i64, tpu.core_type = #tpu.core_type<tc>, window_params = [{transform_indices = @transform_0, window_bounds = array<i64: 16, 32>}, {transform_indices = @transform_1, window_bounds = array<i64: 32, 96>}, {transform_indices = @transform_2, window_bounds = array<i64: 16, 96>}]} {
    %c0_i32 = arith.constant 0 : i32
    %0 = arith.cmpi eq, %arg2, %c0_i32 : i32
    %1 = arith.extui %0 : i1 to i32
    %c0_i32_0 = arith.constant 0 : i32
    %2 = arith.cmpi ne, %1, %c0_i32_0 : i32
    scf.if %2 {
      %cst_10 = arith.constant 0.000000e+00 : f32
      %12 = vector.broadcast %cst_10 : f32 to vector<16x96xf32>
      %c0_11 = arith.constant 0 : index
      %c0_12 = arith.constant 0 : index
      %13 = vector.load %arg6[%c0_11, %c0_12] : memref<16x96xf32, #tpu.memory_space<vmem>>, vector<16x96xf32>
      tpu.vector_store %arg6[%c0_11, %c0_12], %12 {strides = array<i32>} : memref<16x96xf32, #tpu.memory_space<vmem>>, vector<16x96xf32>,
    } else {
    }
    %c0 = arith.constant 0 : index
    %c0_1 = arith.constant 0 : index
    %3 = vector.load %arg6[%c0, %c0_1] : memref<16x96xf32, #tpu.memory_space<vmem>>, vector<16x96xf32>
    %c0_2 = arith.constant 0 : index
    %c0_3 = arith.constant 0 : index
    %4 = vector.load %arg3[%c0_2, %c0_3] : memref<16x32xbf16, #tpu.memory_space<vmem>>, vector<16x32xbf16>
    %c0_4 = arith.constant 0 : index
    %c0_5 = arith.constant 0 : index
    %5 = vector.load %arg4[%c0_4, %c0_5] : memref<32x96xbf16, #tpu.memory_space<vmem>>, vector<32x96xbf16>
    %cst = arith.constant dense<0.000000e+00> : vector<16x96xf32>
    %6 = tpu.matmul %4, %5, %cst {dimension_numbers = #tpu.dot_dimension_numbers<[1], [0], [0], [1], [0, 0, 1, 1], [], []>} : vector<16x32xbf16>, vector<32x96xbf16>, vector<16x96xf32> -> vector<16x96xf32>
    %7 = arith.addf %3, %6 : vector<16x96xf32>
    %c0_6 = arith.constant 0 : index
    %c0_7 = arith.constant 0 : index
    %8 = vector.load %arg6[%c0_6, %c0_7] : memref<16x96xf32, #tpu.memory_space<vmem>>, vector<16x96xf32>
    tpu.vector_store %arg6[%c0_6, %c0_7], %7 {strides = array<i32>} : memref<16x96xf32, #tpu.memory_space<vmem>>, vector<16x96xf32>,
    %c0_i32_8 = arith.constant 0 : i32
    %9 = arith.cmpi eq, %arg2, %c0_i32_8 : i32
    %10 = arith.extui %9 : i1 to i32
    %c0_i32_9 = arith.constant 0 : i32
    %11 = arith.cmpi ne, %10, %c0_i32_9 : i32
    scf.if %11 {
      %c0_10 = arith.constant 0 : index
      %c0_11 = arith.constant 0 : index
      %12 = vector.load %arg6[%c0_10, %c0_11] : memref<16x96xf32, #tpu.memory_space<vmem>>, vector<16x96xf32>
      %13 = arith.truncf %12 : vector<16x96xf32> to vector<16x96xbf16>
      %c0_12 = arith.constant 0 : index
      %c0_13 = arith.constant 0 : index
      %14 = vector.load %arg5[%c0_12, %c0_13] : memref<16x96xbf16, #tpu.memory_space<vmem>>, vector<16x96xbf16>
      tpu.vector_store %arg5[%c0_12, %c0_13], %13 {strides = array<i32>} : memref<16x96xbf16, #tpu.memory_space<vmem>>, vector<16x96xbf16>,
    } else {
    }
    return
  }
  func.func @transform_0(%arg0: i32, %arg1: i32, %arg2: i32) -> (i32, i32) {
    %c0_i32 = arith.constant 0 : i32
    return %arg0, %arg2 : i32, i32
  }
  func.func @transform_1(%arg0: i32, %arg1: i32, %arg2: i32) -> (i32, i32) {
    %c0_i32 = arith.constant 0 : i32
    return %arg2, %arg1 : i32, i32
  }
  func.func @transform_2(%arg0: i32, %arg1: i32, %arg2: i32) -> (i32, i32) {
    %c0_i32 = arith.constant 0 : i32
    return %arg0, %arg1 : i32, i32
  }
}

module attributes {stable_mosaic.version = 11 : i64} {
  func.func @_rmsnorm_kernel(%arg0: i32, %arg1: memref<16x32xbf16, #tpu.memory_space<vmem>>, %arg2: memref<1x32xf32, #tpu.memory_space<vmem>>, %arg3: memref<16x32xbf16, #tpu.memory_space<vmem>>) attributes {dimension_semantics = [#tpu.dimension_semantics<parallel>], iteration_bounds = array<i64: 1>, scalar_prefetch = 0 : i64, scratch_operands = 0 : i64, tpu.core_type = #tpu.core_type<tc>, window_params = [{transform_indices = @transform_0, window_bounds = array<i64: 16, 32>}, {pipeline_mode = #tpu.pipeline_mode<synchronous>, transform_indices = @transform_1, window_bounds = array<i64: 1, 32>}, {transform_indices = @transform_2, window_bounds = array<i64: 16, 32>}]} {
    %c0 = arith.constant 0 : index
    %c0_0 = arith.constant 0 : index
    %0 = vector.load %arg1[%c0, %c0_0] : memref<16x32xbf16, #tpu.memory_space<vmem>>, vector<16x32xbf16>
    %1 = arith.extf %0 : vector<16x32xbf16> to vector<16x32xf32>
    %2 = arith.mulf %1, %1 : vector<16x32xf32>
    %cst = arith.constant dense<0.000000e+00> : vector<16xf32>
    %3 = vector.multi_reduction <add>, %2, %cst [1] : vector<16x32xf32> to vector<16xf32>
    %4 = vector.shape_cast %3 : vector<16xf32> to vector<16x1xf32>
    %cst_1 = arith.constant 3.200000e+01 : f32
    %5 = vector.broadcast %cst_1 : f32 to vector<16x1xf32>
    %6 = arith.divf %4, %5 : vector<16x1xf32>
    %cst_2 = arith.constant 9.99999974E-6 : f32
    %7 = vector.broadcast %cst_2 : f32 to vector<16x1xf32>
    %8 = arith.addf %6, %7 : vector<16x1xf32>
    %9 = math.rsqrt %8 : vector<16x1xf32>
    %10 = vector.broadcast %9 : vector<16x1xf32> to vector<16x32xf32>
    %11 = arith.mulf %1, %10 : vector<16x32xf32>
    %c0_3 = arith.constant 0 : index
    %c0_4 = arith.constant 0 : index
    %12 = vector.load %arg2[%c0_3, %c0_4] : memref<1x32xf32, #tpu.memory_space<vmem>>, vector<1x32xf32>
    %13 = vector.broadcast %12 : vector<1x32xf32> to vector<16x32xf32>
    %14 = arith.mulf %11, %13 : vector<16x32xf32>
    %15 = arith.truncf %14 : vector<16x32xf32> to vector<16x32xbf16>
    %c0_5 = arith.constant 0 : index
    %c0_6 = arith.constant 0 : index
    %16 = vector.load %arg3[%c0_5, %c0_6] : memref<16x32xbf16, #tpu.memory_space<vmem>>, vector<16x32xbf16>
    tpu.vector_store %arg3[%c0_5, %c0_6], %15 {strides = array<i32>} : memref<16x32xbf16, #tpu.memory_space<vmem>>, vector<16x32xbf16>,
    return
  }
  func.func @transform_0(%arg0: i32) -> (i32, i32) {
    %c0_i32 = arith.constant 0 : i32
    %c0_i32_0 = arith.constant 0 : i32
    return %arg0, %c0_i32 : i32, i32
  }
  func.func @transform_1(%arg0: i32) -> (i32, i32) {
    %c0_i32 = arith.constant 0 : i32
    %c0_i32_0 = arith.constant 0 : i32
    %c0_i32_1 = arith.constant 0 : i32
    return %c0_i32, %c0_i32_0 : i32, i32
  }
  func.func @transform_2(%arg0: i32) -> (i32, i32) {
    %c0_i32 = arith.constant 0 : i32
    %c0_i32_0 = arith.constant 0 : i32
    return %arg0, %c0_i32 : i32, i32
  }
}

module attributes {stable_mosaic.version = 11 : i64} {
  func.func @_rope_kernel(%arg0: i32, %arg1: i32, %arg2: memref<1x8x8xbf16, #tpu.memory_space<vmem>>, %arg3: memref<1x8x8xbf16, #tpu.memory_space<vmem>>, %arg4: memref<8x8xf32, #tpu.memory_space<vmem>>, %arg5: memref<8x8xf32, #tpu.memory_space<vmem>>, %arg6: memref<8x8xf32, #tpu.memory_space<vmem>>, %arg7: memref<1x8x8xbf16, #tpu.memory_space<vmem>>, %arg8: memref<1x8x8xbf16, #tpu.memory_space<vmem>>) attributes {dimension_semantics = [#tpu.dimension_semantics<parallel>, #tpu.dimension_semantics<parallel>], iteration_bounds = array<i64: 8, 1>, scalar_prefetch = 0 : i64, scratch_operands = 0 : i64, tpu.core_type = #tpu.core_type<tc>, window_params = [{transform_indices = @transform_0, window_bounds = array<i64: 1, 8, 8>}, {transform_indices = @transform_1, window_bounds = array<i64: 1, 8, 8>}, {transform_indices = @transform_2, window_bounds = array<i64: 8, 8>}, {transform_indices = @transform_3, window_bounds = array<i64: 8, 8>}, {pipeline_mode = #tpu.pipeline_mode<synchronous>, transform_indices = @transform_4, window_bounds = array<i64: 8, 8>}, {transform_indices = @transform_5, window_bounds = array<i64: 1, 8, 8>}, {transform_indices = @transform_6, window_bounds = array<i64: 1, 8, 8>}]} {
    %c0 = arith.constant 0 : index
    %c0_0 = arith.constant 0 : index
    %0 = vector.load %arg4[%c0, %c0_0] : memref<8x8xf32, #tpu.memory_space<vmem>>, vector<8x8xf32>
    %c0_1 = arith.constant 0 : index
    %c0_2 = arith.constant 0 : index
    %1 = vector.load %arg5[%c0_1, %c0_2] : memref<8x8xf32, #tpu.memory_space<vmem>>, vector<8x8xf32>
    %c0_3 = arith.constant 0 : index
    %c0_4 = arith.constant 0 : index
    %2 = vector.load %arg6[%c0_3, %c0_4] : memref<8x8xf32, #tpu.memory_space<vmem>>, vector<8x8xf32>
    %c0_5 = arith.constant 0 : index
    %c0_6 = arith.constant 0 : index
    %c0_7 = arith.constant 0 : index
    %3 = vector.load %arg2[%c0_5, %c0_6, %c0_7] : memref<1x8x8xbf16, #tpu.memory_space<vmem>>, vector<1x8x8xbf16>
    %4 = vector.shape_cast %3 : vector<1x8x8xbf16> to vector<8x8xbf16>
    %5 = arith.extf %4 : vector<8x8xbf16> to vector<8x8xf32>
    %6 = arith.mulf %5, %0 : vector<8x8xf32>
    %cst = arith.constant dense<0.000000e+00> : vector<8x8xf32>
    %7 = tpu.matmul %5, %2, %cst {dimension_numbers = #tpu.dot_dimension_numbers<[1], [0], [0], [1], [0, 0, 1, 1], [], []>} : vector<8x8xf32>, vector<8x8xf32>, vector<8x8xf32> -> vector<8x8xf32>
    %8 = arith.mulf %7, %1 : vector<8x8xf32>
    %9 = arith.addf %6, %8 : vector<8x8xf32>
    %cst_8 = arith.constant 0.353553385 : f32
    %10 = vector.broadcast %cst_8 : f32 to vector<8x8xf32>
    %11 = arith.mulf %9, %10 : vector<8x8xf32>
    %12 = arith.truncf %11 : vector<8x8xf32> to vector<8x8xbf16>
    %c0_9 = arith.constant 0 : index
    %c0_10 = arith.constant 0 : index
    %c0_11 = arith.constant 0 : index
    %13 = vector.load %arg7[%c0_9, %c0_10, %c0_11] : memref<1x8x8xbf16, #tpu.memory_space<vmem>>, vector<1x8x8xbf16>
    %14 = vector.shape_cast %13 : vector<1x8x8xbf16> to vector<8x8xbf16>
    %15 = vector.shape_cast %12 : vector<8x8xbf16> to vector<1x8x8xbf16>
    tpu.vector_store %arg7[%c0_9, %c0_10, %c0_11], %15 {strides = array<i32>} : memref<1x8x8xbf16, #tpu.memory_space<vmem>>, vector<1x8x8xbf16>,
    %c0_12 = arith.constant 0 : index
    %c0_13 = arith.constant 0 : index
    %c0_14 = arith.constant 0 : index
    %16 = vector.load %arg3[%c0_12, %c0_13, %c0_14] : memref<1x8x8xbf16, #tpu.memory_space<vmem>>, vector<1x8x8xbf16>
    %17 = vector.shape_cast %16 : vector<1x8x8xbf16> to vector<8x8xbf16>
    %18 = arith.extf %17 : vector<8x8xbf16> to vector<8x8xf32>
    %19 = arith.mulf %18, %0 : vector<8x8xf32>
    %cst_15 = arith.constant dense<0.000000e+00> : vector<8x8xf32>
    %20 = tpu.matmul %18, %2, %cst_15 {dimension_numbers = #tpu.dot_dimension_numbers<[1], [0], [0], [1], [0, 0, 1, 1], [], []>} : vector<8x8xf32>, vector<8x8xf32>, vector<8x8xf32> -> vector<8x8xf32>
    %21 = arith.mulf %20, %1 : vector<8x8xf32>
    %22 = arith.addf %19, %21 : vector<8x8xf32>
    %23 = arith.truncf %22 : vector<8x8xf32> to vector<8x8xbf16>
    %c0_16 = arith.constant 0 : index
    %c0_17 = arith.constant 0 : index
    %c0_18 = arith.constant 0 : index
    %24 = vector.load %arg8[%c0_16, %c0_17, %c0_18] : memref<1x8x8xbf16, #tpu.memory_space<vmem>>, vector<1x8x8xbf16>
    %25 = vector.shape_cast %24 : vector<1x8x8xbf16> to vector<8x8xbf16>
    %26 = vector.shape_cast %23 : vector<8x8xbf16> to vector<1x8x8xbf16>
    tpu.vector_store %arg8[%c0_16, %c0_17, %c0_18], %26 {strides = array<i32>} : memref<1x8x8xbf16, #tpu.memory_space<vmem>>, vector<1x8x8xbf16>,
    return
  }
  func.func @transform_0(%arg0: i32, %arg1: i32) -> (i32, i32, i32) {
    %c0_i32 = arith.constant 0 : i32
    %c0_i32_0 = arith.constant 0 : i32
    return %arg0, %arg1, %c0_i32 : i32, i32, i32
  }
  func.func @transform_1(%arg0: i32, %arg1: i32) -> (i32, i32, i32) {
    %c0_i32 = arith.constant 0 : i32
    %c0_i32_0 = arith.constant 0 : i32
    return %arg0, %arg1, %c0_i32 : i32, i32, i32
  }
  func.func @transform_2(%arg0: i32, %arg1: i32) -> (i32, i32) {
    %c0_i32 = arith.constant 0 : i32
    %c0_i32_0 = arith.constant 0 : i32
    return %arg1, %c0_i32 : i32, i32
  }
  func.func @transform_3(%arg0: i32, %arg1: i32) -> (i32, i32) {
    %c0_i32 = arith.constant 0 : i32
    %c0_i32_0 = arith.constant 0 : i32
    return %arg1, %c0_i32 : i32, i32
  }
  func.func @transform_4(%arg0: i32, %arg1: i32) -> (i32, i32) {
    %c0_i32 = arith.constant 0 : i32
    %c0_i32_0 = arith.constant 0 : i32
    %c0_i32_1 = arith.constant 0 : i32
    return %c0_i32, %c0_i32_0 : i32, i32
  }
  func.func @transform_5(%arg0: i32, %arg1: i32) -> (i32, i32, i32) {
    %c0_i32 = arith.constant 0 : i32
    %c0_i32_0 = arith.constant 0 : i32
    return %arg0, %arg1, %c0_i32 : i32, i32, i32
  }
  func.func @transform_6(%arg0: i32, %arg1: i32) -> (i32, i32, i32) {
    %c0_i32 = arith.constant 0 : i32
    %c0_i32_0 = arith.constant 0 : i32
    return %arg0, %arg1, %c0_i32 : i32, i32, i32
  }
}

module attributes {stable_mosaic.version = 11 : i64} {
  func.func @_flash_attn_kernel(%arg0: i32, %arg1: i32, %arg2: i32, %arg3: memref<1x8x8xbf16, #tpu.memory_space<vmem>>, %arg4: memref<1x8x8xbf16, #tpu.memory_space<vmem>>, %arg5: memref<1x8x8xbf16, #tpu.memory_space<vmem>>, %arg6: memref<1x8x8xbf16, #tpu.memory_space<vmem>>, %arg7: memref<8x1xf32, #tpu.memory_space<vmem>>, %arg8: memref<8x1xf32, #tpu.memory_space<vmem>>, %arg9: memref<8x8xf32, #tpu.memory_space<vmem>>) attributes {dimension_semantics = [#tpu.dimension_semantics<parallel>, #tpu.dimension_semantics<parallel>, #tpu.dimension_semantics<arbitrary>], iteration_bounds = array<i64: 8, 1, 1>, scalar_prefetch = 0 : i64, scratch_operands = 3 : i64, tpu.core_type = #tpu.core_type<tc>, window_params = [{transform_indices = @transform_0, window_bounds = array<i64: 1, 8, 8>}, {transform_indices = @transform_1, window_bounds = array<i64: 1, 8, 8>}, {transform_indices = @transform_2, window_bounds = array<i64: 1, 8, 8>}, {transform_indices = @transform_3, window_bounds = array<i64: 1, 8, 8>}]} {
    %c0_i32 = arith.constant 0 : i32
    %0 = arith.cmpi eq, %arg2, %c0_i32 : i32
    %1 = arith.extui %0 : i1 to i32
    %c0_i32_0 = arith.constant 0 : i32
    %2 = arith.cmpi ne, %1, %c0_i32_0 : i32
    scf.if %2 {
      %cst = arith.constant 0xFF800000 : f32
      %13 = vector.broadcast %cst : f32 to vector<8x1xf32>
      %c0 = arith.constant 0 : index
      %c0_6 = arith.constant 0 : index
      %14 = vector.load %arg7[%c0, %c0_6] : memref<8x1xf32, #tpu.memory_space<vmem>>, vector<8x1xf32>
      tpu.vector_store %arg7[%c0, %c0_6], %13 {strides = array<i32>} : memref<8x1xf32, #tpu.memory_space<vmem>>, vector<8x1xf32>,
      %cst_7 = arith.constant 0.000000e+00 : f32
      %15 = vector.broadcast %cst_7 : f32 to vector<8x1xf32>
      %c0_8 = arith.constant 0 : index
      %c0_9 = arith.constant 0 : index
      %16 = vector.load %arg8[%c0_8, %c0_9] : memref<8x1xf32, #tpu.memory_space<vmem>>, vector<8x1xf32>
      tpu.vector_store %arg8[%c0_8, %c0_9], %15 {strides = array<i32>} : memref<8x1xf32, #tpu.memory_space<vmem>>, vector<8x1xf32>,
      %cst_10 = arith.constant 0.000000e+00 : f32
      %17 = vector.broadcast %cst_10 : f32 to vector<8x8xf32>
      %c0_11 = arith.constant 0 : index
      %c0_12 = arith.constant 0 : index
      %18 = vector.load %arg9[%c0_11, %c0_12] : memref<8x8xf32, #tpu.memory_space<vmem>>, vector<8x8xf32>
      tpu.vector_store %arg9[%c0_11, %c0_12], %17 {strides = array<i32>} : memref<8x8xf32, #tpu.memory_space<vmem>>, vector<8x8xf32>,
    } else {
    }
    %c8_i32 = arith.constant 8 : i32
    %3 = arith.muli %arg1, %c8_i32 : i32
    %c8_i32_1 = arith.constant 8 : i32
    %4 = arith.muli %arg2, %c8_i32_1 : i32
    %c8_i32_2 = arith.constant 8 : i32
    %5 = arith.addi %3, %c8_i32_2 : i32
    %c1_i32 = arith.constant 1 : i32
    %6 = arith.subi %5, %c1_i32 : i32
    %7 = arith.cmpi sle, %4, %6 : i32
    %8 = arith.extui %7 : i1 to i32
    %c0_i32_3 = arith.constant 0 : i32
    %9 = arith.cmpi ne, %8, %c0_i32_3 : i32
    scf.if %9 {
      %c0 = arith.constant 0 : index
      %c0_6 = arith.constant 0 : index
      %c0_7 = arith.constant 0 : index
      %13 = vector.load %arg3[%c0, %c0_6, %c0_7] : memref<1x8x8xbf16, #tpu.memory_space<vmem>>, vector<1x8x8xbf16>
      %14 = vector.shape_cast %13 : vector<1x8x8xbf16> to vector<8x8xbf16>
      %c0_8 = arith.constant 0 : index
      %c0_9 = arith.constant 0 : index
      %c0_10 = arith.constant 0 : index
      %15 = vector.load %arg4[%c0_8, %c0_9, %c0_10] : memref<1x8x8xbf16, #tpu.memory_space<vmem>>, vector<1x8x8xbf16>
      %16 = vector.shape_cast %15 : vector<1x8x8xbf16> to vector<8x8xbf16>
      %c0_11 = arith.constant 0 : index
      %c0_12 = arith.constant 0 : index
      %c0_13 = arith.constant 0 : index
      %17 = vector.load %arg5[%c0_11, %c0_12, %c0_13] : memref<1x8x8xbf16, #tpu.memory_space<vmem>>, vector<1x8x8xbf16>
      %18 = vector.shape_cast %17 : vector<1x8x8xbf16> to vector<8x8xbf16>
      %cst = arith.constant dense<0.000000e+00> : vector<8x8xf32>
      %19 = tpu.matmul %14, %16, %cst {dimension_numbers = #tpu.dot_dimension_numbers<[1], [1], [0], [0], [0, 0, 1, 0], [], []>} : vector<8x8xbf16>, vector<8x8xbf16>, vector<8x8xf32> -> vector<8x8xf32>
      %20 = tpu.iota {dimensions = array<i32: 0>} : vector<8x8xi32>
      %21 = vector.broadcast %3 : i32 to vector<8x8xi32>
      %22 = arith.addi %21, %20 : vector<8x8xi32>
      %23 = tpu.iota {dimensions = array<i32: 1>} : vector<8x8xi32>
      %24 = vector.broadcast %4 : i32 to vector<8x8xi32>
      %25 = arith.addi %24, %23 : vector<8x8xi32>
      %26 = arith.cmpi sle, %25, %22 : vector<8x8xi32>
      %cst_14 = arith.constant 0xFF800000 : f32
      %27 = vector.broadcast %cst_14 : f32 to vector<8x8xf32>
      %28 = arith.select %26, %19, %27 : vector<8x8xi1>, vector<8x8xf32>
      %c0_15 = arith.constant 0 : index
      %c0_16 = arith.constant 0 : index
      %29 = vector.load %arg7[%c0_15, %c0_16] : memref<8x1xf32, #tpu.memory_space<vmem>>, vector<8x1xf32>
      %cst_17 = arith.constant dense<0xFF800000> : vector<8xf32>
      %30 = vector.multi_reduction <maximumf>, %28, %cst_17 [1] : vector<8x8xf32> to vector<8xf32>
      %31 = vector.shape_cast %30 : vector<8xf32> to vector<8x1xf32>
      %32 = arith.maximumf %29, %31 : vector<8x1xf32>
      %33 = arith.subf %29, %32 : vector<8x1xf32>
      %34 = math.exp %33 : vector<8x1xf32>
      %35 = vector.broadcast %32 : vector<8x1xf32> to vector<8x8xf32>
      %36 = arith.subf %28, %35 : vector<8x8xf32>
      %37 = math.exp %36 : vector<8x8xf32>
      %c0_18 = arith.constant 0 : index
      %c0_19 = arith.constant 0 : index
      %38 = vector.load %arg8[%c0_18, %c0_19] : memref<8x1xf32, #tpu.memory_space<vmem>>, vector<8x1xf32>
      %39 = arith.mulf %34, %38 : vector<8x1xf32>
      %cst_20 = arith.constant dense<0.000000e+00> : vector<8xf32>
      %40 = vector.multi_reduction <add>, %37, %cst_20 [1] : vector<8x8xf32> to vector<8xf32>
      %41 = vector.shape_cast %40 : vector<8xf32> to vector<8x1xf32>
      %42 = arith.addf %39, %41 : vector<8x1xf32>
      %c0_21 = arith.constant 0 : index
      %c0_22 = arith.constant 0 : index
      %43 = vector.load %arg8[%c0_21, %c0_22] : memref<8x1xf32, #tpu.memory_space<vmem>>, vector<8x1xf32>
      tpu.vector_store %arg8[%c0_21, %c0_22], %42 {strides = array<i32>} : memref<8x1xf32, #tpu.memory_space<vmem>>, vector<8x1xf32>,
      %c0_23 = arith.constant 0 : index
      %c0_24 = arith.constant 0 : index
      %44 = vector.load %arg9[%c0_23, %c0_24] : memref<8x8xf32, #tpu.memory_space<vmem>>, vector<8x8xf32>
      %45 = vector.broadcast %34 : vector<8x1xf32> to vector<8x8xf32>
      %46 = arith.mulf %45, %44 : vector<8x8xf32>
      %47 = arith.truncf %37 : vector<8x8xf32> to vector<8x8xbf16>
      %cst_25 = arith.constant dense<0.000000e+00> : vector<8x8xf32>
      %48 = tpu.matmul %47, %18, %cst_25 {dimension_numbers = #tpu.dot_dimension_numbers<[1], [0], [0], [1], [0, 0, 1, 1], [], []>} : vector<8x8xbf16>, vector<8x8xbf16>, vector<8x8xf32> -> vector<8x8xf32>
      %49 = arith.addf %46, %48 : vector<8x8xf32>
      %c0_26 = arith.constant 0 : index
      %c0_27 = arith.constant 0 : index
      %50 = vector.load %arg9[%c0_26, %c0_27] : memref<8x8xf32, #tpu.memory_space<vmem>>, vector<8x8xf32>
      tpu.vector_store %arg9[%c0_26, %c0_27], %49 {strides = array<i32>} : memref<8x8xf32, #tpu.memory_space<vmem>>, vector<8x8xf32>,
      %c0_28 = arith.constant 0 : index
      %c0_29 = arith.constant 0 : index
      %51 = vector.load %arg7[%c0_28, %c0_29] : memref<8x1xf32, #tpu.memory_space<vmem>>, vector<8x1xf32>
      tpu.vector_store %arg7[%c0_28, %c0_29], %32 {strides = array<i32>} : memref<8x1xf32, #tpu.memory_space<vmem>>, vector<8x1xf32>,
    } else {
    }
    %c0_i32_4 = arith.constant 0 : i32
    %10 = arith.cmpi eq, %arg2, %c0_i32_4 : i32
    %11 = arith.extui %10 : i1 to i32
    %c0_i32_5 = arith.constant 0 : i32
    %12 = arith.cmpi ne, %11, %c0_i32_5 : i32
    scf.if %12 {
      %c0 = arith.constant 0 : index
      %c0_6 = arith.constant 0 : index
      %13 = vector.load %arg8[%c0, %c0_6] : memref<8x1xf32, #tpu.memory_space<vmem>>, vector<8x1xf32>
      %14 = tpu.reciprocal %13 {approx = true} : vector<8x1xf32> -> vector<8x1xf32>
      %c0_7 = arith.constant 0 : index
      %c0_8 = arith.constant 0 : index
      %15 = vector.load %arg9[%c0_7, %c0_8] : memref<8x8xf32, #tpu.memory_space<vmem>>, vector<8x8xf32>
      %16 = vector.broadcast %14 : vector<8x1xf32> to vector<8x8xf32>
      %17 = arith.mulf %15, %16 : vector<8x8xf32>
      %18 = arith.truncf %17 : vector<8x8xf32> to vector<8x8xbf16>
      %c0_9 = arith.constant 0 : index
      %c0_10 = arith.constant 0 : index
      %c0_11 = arith.constant 0 : index
      %19 = vector.load %arg6[%c0_9, %c0_10, %c0_11] : memref<1x8x8xbf16, #tpu.memory_space<vmem>>, vector<1x8x8xbf16>
      %20 = vector.shape_cast %19 : vector<1x8x8xbf16> to vector<8x8xbf16>
      %21 = vector.shape_cast %18 : vector<8x8xbf16> to vector<1x8x8xbf16>
      tpu.vector_store %arg6[%c0_9, %c0_10, %c0_11], %21 {strides = array<i32>} : memref<1x8x8xbf16, #tpu.memory_space<vmem>>, vector<1x8x8xbf16>,
    } else {
    }
    return
  }
  func.func @transform_0(%arg0: i32, %arg1: i32, %arg2: i32) -> (i32, i32, i32) {
    %c0_i32 = arith.constant 0 : i32
    %c0_i32_0 = arith.constant 0 : i32
    return %arg0, %arg1, %c0_i32 : i32, i32, i32
  }
  func.func @transform_1(%arg0: i32, %arg1: i32, %arg2: i32) -> (i32, i32, i32) {
    %c0_i32 = arith.constant 0 : i32
    %c0_i32_0 = arith.constant 0 : i32
    return %arg0, %arg2, %c0_i32 : i32, i32, i32
  }
  func.func @transform_2(%arg0: i32, %arg1: i32, %arg2: i32) -> (i32, i32, i32) {
    %c0_i32 = arith.constant 0 : i32
    %c0_i32_0 = arith.constant 0 : i32
    return %arg0, %arg2, %c0_i32 : i32, i32, i32
  }
  func.func @transform_3(%arg0: i32, %arg1: i32, %arg2: i32) -> (i32, i32, i32) {
    %c0_i32 = arith.constant 0 : i32
    %c0_i32_0 = arith.constant 0 : i32
    return %arg0, %arg1, %c0_i32 : i32, i32, i32
  }
}

module attributes {stable_mosaic.version = 11 : i64} {
  func.func @_matmul_residual_kernel(%arg0: i32, %arg1: i32, %arg2: i32, %arg3: memref<16x32xbf16, #tpu.memory_space<vmem>>, %arg4: memref<32x32xbf16, #tpu.memory_space<vmem>>, %arg5: memref<16x32xbf16, #tpu.memory_space<vmem>>, %arg6: memref<16x32xbf16, #tpu.memory_space<vmem>>, %arg7: memref<16x32xf32, #tpu.memory_space<vmem>>) attributes {dimension_semantics = [#tpu.dimension_semantics<parallel>, #tpu.dimension_semantics<parallel>, #tpu.dimension_semantics<arbitrary>], iteration_bounds = array<i64: 1, 1, 1>, scalar_prefetch = 0 : i64, scratch_operands = 1 : i64, tpu.core_type = #tpu.core_type<tc>, window_params = [{transform_indices = @transform_0, window_bounds = array<i64: 16, 32>}, {transform_indices = @transform_1, window_bounds = array<i64: 32, 32>}, {transform_indices = @transform_2, window_bounds = array<i64: 16, 32>}, {transform_indices = @transform_3, window_bounds = array<i64: 16, 32>}]} {
    %c0_i32 = arith.constant 0 : i32
    %0 = arith.cmpi eq, %arg2, %c0_i32 : i32
    %1 = arith.extui %0 : i1 to i32
    %c0_i32_0 = arith.constant 0 : i32
    %2 = arith.cmpi ne, %1, %c0_i32_0 : i32
    scf.if %2 {
      %cst_10 = arith.constant 0.000000e+00 : f32
      %12 = vector.broadcast %cst_10 : f32 to vector<16x32xf32>
      %c0_11 = arith.constant 0 : index
      %c0_12 = arith.constant 0 : index
      %13 = vector.load %arg7[%c0_11, %c0_12] : memref<16x32xf32, #tpu.memory_space<vmem>>, vector<16x32xf32>
      tpu.vector_store %arg7[%c0_11, %c0_12], %12 {strides = array<i32>} : memref<16x32xf32, #tpu.memory_space<vmem>>, vector<16x32xf32>,
    } else {
    }
    %c0 = arith.constant 0 : index
    %c0_1 = arith.constant 0 : index
    %3 = vector.load %arg7[%c0, %c0_1] : memref<16x32xf32, #tpu.memory_space<vmem>>, vector<16x32xf32>
    %c0_2 = arith.constant 0 : index
    %c0_3 = arith.constant 0 : index
    %4 = vector.load %arg3[%c0_2, %c0_3] : memref<16x32xbf16, #tpu.memory_space<vmem>>, vector<16x32xbf16>
    %c0_4 = arith.constant 0 : index
    %c0_5 = arith.constant 0 : index
    %5 = vector.load %arg4[%c0_4, %c0_5] : memref<32x32xbf16, #tpu.memory_space<vmem>>, vector<32x32xbf16>
    %cst = arith.constant dense<0.000000e+00> : vector<16x32xf32>
    %6 = tpu.matmul %4, %5, %cst {dimension_numbers = #tpu.dot_dimension_numbers<[1], [0], [0], [1], [0, 0, 1, 1], [], []>} : vector<16x32xbf16>, vector<32x32xbf16>, vector<16x32xf32> -> vector<16x32xf32>
    %7 = arith.addf %3, %6 : vector<16x32xf32>
    %c0_6 = arith.constant 0 : index
    %c0_7 = arith.constant 0 : index
    %8 = vector.load %arg7[%c0_6, %c0_7] : memref<16x32xf32, #tpu.memory_space<vmem>>, vector<16x32xf32>
    tpu.vector_store %arg7[%c0_6, %c0_7], %7 {strides = array<i32>} : memref<16x32xf32, #tpu.memory_space<vmem>>, vector<16x32xf32>,
    %c0_i32_8 = arith.constant 0 : i32
    %9 = arith.cmpi eq, %arg2, %c0_i32_8 : i32
    %10 = arith.extui %9 : i1 to i32
    %c0_i32_9 = arith.constant 0 : i32
    %11 = arith.cmpi ne, %10, %c0_i32_9 : i32
    scf.if %11 {
      %c0_10 = arith.constant 0 : index
      %c0_11 = arith.constant 0 : index
      %12 = vector.load %arg7[%c0_10, %c0_11] : memref<16x32xf32, #tpu.memory_space<vmem>>, vector<16x32xf32>
      %c0_12 = arith.constant 0 : index
      %c0_13 = arith.constant 0 : index
      %13 = vector.load %arg5[%c0_12, %c0_13] : memref<16x32xbf16, #tpu.memory_space<vmem>>, vector<16x32xbf16>
      %14 = arith.extf %13 : vector<16x32xbf16> to vector<16x32xf32>
      %15 = arith.addf %12, %14 : vector<16x32xf32>
      %16 = arith.truncf %15 : vector<16x32xf32> to vector<16x32xbf16>
      %c0_14 = arith.constant 0 : index
      %c0_15 = arith.constant 0 : index
      %17 = vector.load %arg6[%c0_14, %c0_15] : memref<16x32xbf16, #tpu.memory_space<vmem>>, vector<16x32xbf16>
      tpu.vector_store %arg6[%c0_14, %c0_15], %16 {strides = array<i32>} : memref<16x32xbf16, #tpu.memory_space<vmem>>, vector<16x32xbf16>,
    } else {
    }
    return
  }
  func.func @transform_0(%arg0: i32, %arg1: i32, %arg2: i32) -> (i32, i32) {
    %c0_i32 = arith.constant 0 : i32
    return %arg0, %arg2 : i32, i32
  }
  func.func @transform_1(%arg0: i32, %arg1: i32, %arg2: i32) -> (i32, i32) {
    %c0_i32 = arith.constant 0 : i32
    return %arg2, %arg1 : i32, i32
  }
  func.func @transform_2(%arg0: i32, %arg1: i32, %arg2: i32) -> (i32, i32) {
    %c0_i32 = arith.constant 0 : i32
    return %arg0, %arg1 : i32, i32
  }
  func.func @transform_3(%arg0: i32, %arg1: i32, %arg2: i32) -> (i32, i32) {
    %c0_i32 = arith.constant 0 : i32
    return %arg0, %arg1 : i32, i32
  }
}

module attributes {stable_mosaic.version = 11 : i64} {
  func.func @_ffn_kernel(%arg0: i32, %arg1: i32, %arg2: memref<16x32xbf16, #tpu.memory_space<vmem>>, %arg3: memref<32x96xbf16, #tpu.memory_space<vmem>>, %arg4: memref<32x96xbf16, #tpu.memory_space<vmem>>, %arg5: memref<96x32xbf16, #tpu.memory_space<vmem>>, %arg6: memref<16x32xbf16, #tpu.memory_space<vmem>>, %arg7: memref<16x32xbf16, #tpu.memory_space<vmem>>, %arg8: memref<16x32xf32, #tpu.memory_space<vmem>>) attributes {dimension_semantics = [#tpu.dimension_semantics<parallel>, #tpu.dimension_semantics<arbitrary>], iteration_bounds = array<i64: 1, 1>, scalar_prefetch = 0 : i64, scratch_operands = 1 : i64, tpu.core_type = #tpu.core_type<tc>, window_params = [{transform_indices = @transform_0, window_bounds = array<i64: 16, 32>}, {transform_indices = @transform_1, window_bounds = array<i64: 32, 96>}, {transform_indices = @transform_2, window_bounds = array<i64: 32, 96>}, {transform_indices = @transform_3, window_bounds = array<i64: 96, 32>}, {transform_indices = @transform_4, window_bounds = array<i64: 16, 32>}, {transform_indices = @transform_5, window_bounds = array<i64: 16, 32>}]} {
    %c0_i32 = arith.constant 0 : i32
    %0 = arith.cmpi eq, %arg1, %c0_i32 : i32
    %1 = arith.extui %0 : i1 to i32
    %c0_i32_0 = arith.constant 0 : i32
    %2 = arith.cmpi ne, %1, %c0_i32_0 : i32
    scf.if %2 {
      %cst_17 = arith.constant 0.000000e+00 : f32
      %24 = vector.broadcast %cst_17 : f32 to vector<16x32xf32>
      %c0_18 = arith.constant 0 : index
      %c0_19 = arith.constant 0 : index
      %25 = vector.load %arg8[%c0_18, %c0_19] : memref<16x32xf32, #tpu.memory_space<vmem>>, vector<16x32xf32>
      tpu.vector_store %arg8[%c0_18, %c0_19], %24 {strides = array<i32>} : memref<16x32xf32, #tpu.memory_space<vmem>>, vector<16x32xf32>,
    } else {
    }
    %c0 = arith.constant 0 : index
    %c0_1 = arith.constant 0 : index
    %3 = vector.load %arg2[%c0, %c0_1] : memref<16x32xbf16, #tpu.memory_space<vmem>>, vector<16x32xbf16>
    %c0_2 = arith.constant 0 : index
    %c0_3 = arith.constant 0 : index
    %4 = vector.load %arg3[%c0_2, %c0_3] : memref<32x96xbf16, #tpu.memory_space<vmem>>, vector<32x96xbf16>
    %cst = arith.constant dense<0.000000e+00> : vector<16x96xf32>
    %5 = tpu.matmul %3, %4, %cst {dimension_numbers = #tpu.dot_dimension_numbers<[1], [0], [0], [1], [0, 0, 1, 1], [], []>} : vector<16x32xbf16>, vector<32x96xbf16>, vector<16x96xf32> -> vector<16x96xf32>
    %c0_4 = arith.constant 0 : index
    %c0_5 = arith.constant 0 : index
    %6 = vector.load %arg4[%c0_4, %c0_5] : memref<32x96xbf16, #tpu.memory_space<vmem>>, vector<32x96xbf16>
    %cst_6 = arith.constant dense<0.000000e+00> : vector<16x96xf32>
    %7 = tpu.matmul %3, %6, %cst_6 {dimension_numbers = #tpu.dot_dimension_numbers<[1], [0], [0], [1], [0, 0, 1, 1], [], []>} : vector<16x32xbf16>, vector<32x96xbf16>, vector<16x96xf32> -> vector<16x96xf32>
    %8 = arith.negf %5 : vector<16x96xf32>
    %9 = math.exp %8 : vector<16x96xf32>
    %cst_7 = arith.constant 1.000000e+00 : f32
    %10 = vector.broadcast %cst_7 : f32 to vector<16x96xf32>
    %11 = arith.addf %10, %9 : vector<16x96xf32>
    %12 = arith.divf %10, %11 : vector<16x96xf32>
    %13 = arith.mulf %5, %12 : vector<16x96xf32>
    %14 = arith.mulf %13, %7 : vector<16x96xf32>
    %c0_8 = arith.constant 0 : index
    %c0_9 = arith.constant 0 : index
    %15 = vector.load %arg8[%c0_8, %c0_9] : memref<16x32xf32, #tpu.memory_space<vmem>>, vector<16x32xf32>
    %16 = arith.truncf %14 : vector<16x96xf32> to vector<16x96xbf16>
    %c0_10 = arith.constant 0 : index
    %c0_11 = arith.constant 0 : index
    %17 = vector.load %arg5[%c0_10, %c0_11] : memref<96x32xbf16, #tpu.memory_space<vmem>>, vector<96x32xbf16>
    %cst_12 = arith.constant dense<0.000000e+00> : vector<16x32xf32>
    %18 = tpu.matmul %16, %17, %cst_12 {dimension_numbers = #tpu.dot_dimension_numbers<[1], [0], [0], [1], [0, 0, 1, 1], [], []>} : vector<16x96xbf16>, vector<96x32xbf16>, vector<16x32xf32> -> vector<16x32xf32>
    %19 = arith.addf %15, %18 : vector<16x32xf32>
    %c0_13 = arith.constant 0 : index
    %c0_14 = arith.constant 0 : index
    %20 = vector.load %arg8[%c0_13, %c0_14] : memref<16x32xf32, #tpu.memory_space<vmem>>, vector<16x32xf32>
    tpu.vector_store %arg8[%c0_13, %c0_14], %19 {strides = array<i32>} : memref<16x32xf32, #tpu.memory_space<vmem>>, vector<16x32xf32>,
    %c0_i32_15 = arith.constant 0 : i32
    %21 = arith.cmpi eq, %arg1, %c0_i32_15 : i32
    %22 = arith.extui %21 : i1 to i32
    %c0_i32_16 = arith.constant 0 : i32
    %23 = arith.cmpi ne, %22, %c0_i32_16 : i32
    scf.if %23 {
      %c0_17 = arith.constant 0 : index
      %c0_18 = arith.constant 0 : index
      %24 = vector.load %arg8[%c0_17, %c0_18] : memref<16x32xf32, #tpu.memory_space<vmem>>, vector<16x32xf32>
      %c0_19 = arith.constant 0 : index
      %c0_20 = arith.constant 0 : index
      %25 = vector.load %arg6[%c0_19, %c0_20] : memref<16x32xbf16, #tpu.memory_space<vmem>>, vector<16x32xbf16>
      %26 = arith.extf %25 : vector<16x32xbf16> to vector<16x32xf32>
      %27 = arith.addf %24, %26 : vector<16x32xf32>
      %28 = arith.truncf %27 : vector<16x32xf32> to vector<16x32xbf16>
      %c0_21 = arith.constant 0 : index
      %c0_22 = arith.constant 0 : index
      %29 = vector.load %arg7[%c0_21, %c0_22] : memref<16x32xbf16, #tpu.memory_space<vmem>>, vector<16x32xbf16>
      tpu.vector_store %arg7[%c0_21, %c0_22], %28 {strides = array<i32>} : memref<16x32xbf16, #tpu.memory_space<vmem>>, vector<16x32xbf16>,
    } else {
    }
    return
  }
  func.func @transform_0(%arg0: i32, %arg1: i32) -> (i32, i32) {
    %c0_i32 = arith.constant 0 : i32
    %c0_i32_0 = arith.constant 0 : i32
    return %arg0, %c0_i32 : i32, i32
  }
  func.func @transform_1(%arg0: i32, %arg1: i32) -> (i32, i32) {
    %c0_i32 = arith.constant 0 : i32
    %c0_i32_0 = arith.constant 0 : i32
    return %c0_i32, %arg1 : i32, i32
  }
  func.func @transform_2(%arg0: i32, %arg1: i32) -> (i32, i32) {
    %c0_i32 = arith.constant 0 : i32
    %c0_i32_0 = arith.constant 0 : i32
    return %c0_i32, %arg1 : i32, i32
  }
  func.func @transform_3(%arg0: i32, %arg1: i32) -> (i32, i32) {
    %c0_i32 = arith.constant 0 : i32
    %c0_i32_0 = arith.constant 0 : i32
    return %arg1, %c0_i32 : i32, i32
  }
  func.func @transform_4(%arg0: i32, %arg1: i32) -> (i32, i32) {
    %c0_i32 = arith.constant 0 : i32
    %c0_i32_0 = arith.constant 0 : i32
    return %arg0, %c0_i32 : i32, i32
  }
  func.func @transform_5(%arg0: i32, %arg1: i32) -> (i32, i32) {
    %c0_i32 = arith.constant 0 : i32
    %c0_i32_0 = arith.constant 0 : i32
    return %arg0, %c0_i32 : i32, i32
  }
}

module attributes {stable_mosaic.version = 11 : i64} {
  func.func @_matmul_kernel(%arg0: i32, %arg1: i32, %arg2: i32, %arg3: memref<16x32xbf16, #tpu.memory_space<vmem>>, %arg4: memref<32x64xbf16, #tpu.memory_space<vmem>>, %arg5: memref<16x64xf32, #tpu.memory_space<vmem>>, %arg6: memref<16x64xf32, #tpu.memory_space<vmem>>) attributes {dimension_semantics = [#tpu.dimension_semantics<parallel>, #tpu.dimension_semantics<parallel>, #tpu.dimension_semantics<arbitrary>], iteration_bounds = array<i64: 1, 1, 1>, scalar_prefetch = 0 : i64, scratch_operands = 1 : i64, tpu.core_type = #tpu.core_type<tc>, window_params = [{transform_indices = @transform_0, window_bounds = array<i64: 16, 32>}, {transform_indices = @transform_1, window_bounds = array<i64: 32, 64>}, {transform_indices = @transform_2, window_bounds = array<i64: 16, 64>}]} {
    %c0_i32 = arith.constant 0 : i32
    %0 = arith.cmpi eq, %arg2, %c0_i32 : i32
    %1 = arith.extui %0 : i1 to i32
    %c0_i32_0 = arith.constant 0 : i32
    %2 = arith.cmpi ne, %1, %c0_i32_0 : i32
    scf.if %2 {
      %cst_10 = arith.constant 0.000000e+00 : f32
      %12 = vector.broadcast %cst_10 : f32 to vector<16x64xf32>
      %c0_11 = arith.constant 0 : index
      %c0_12 = arith.constant 0 : index
      %13 = vector.load %arg6[%c0_11, %c0_12] : memref<16x64xf32, #tpu.memory_space<vmem>>, vector<16x64xf32>
      tpu.vector_store %arg6[%c0_11, %c0_12], %12 {strides = array<i32>} : memref<16x64xf32, #tpu.memory_space<vmem>>, vector<16x64xf32>,
    } else {
    }
    %c0 = arith.constant 0 : index
    %c0_1 = arith.constant 0 : index
    %3 = vector.load %arg6[%c0, %c0_1] : memref<16x64xf32, #tpu.memory_space<vmem>>, vector<16x64xf32>
    %c0_2 = arith.constant 0 : index
    %c0_3 = arith.constant 0 : index
    %4 = vector.load %arg3[%c0_2, %c0_3] : memref<16x32xbf16, #tpu.memory_space<vmem>>, vector<16x32xbf16>
    %c0_4 = arith.constant 0 : index
    %c0_5 = arith.constant 0 : index
    %5 = vector.load %arg4[%c0_4, %c0_5] : memref<32x64xbf16, #tpu.memory_space<vmem>>, vector<32x64xbf16>
    %cst = arith.constant dense<0.000000e+00> : vector<16x64xf32>
    %6 = tpu.matmul %4, %5, %cst {dimension_numbers = #tpu.dot_dimension_numbers<[1], [0], [0], [1], [0, 0, 1, 1], [], []>} : vector<16x32xbf16>, vector<32x64xbf16>, vector<16x64xf32> -> vector<16x64xf32>
    %7 = arith.addf %3, %6 : vector<16x64xf32>
    %c0_6 = arith.constant 0 : index
    %c0_7 = arith.constant 0 : index
    %8 = vector.load %arg6[%c0_6, %c0_7] : memref<16x64xf32, #tpu.memory_space<vmem>>, vector<16x64xf32>
    tpu.vector_store %arg6[%c0_6, %c0_7], %7 {strides = array<i32>} : memref<16x64xf32, #tpu.memory_space<vmem>>, vector<16x64xf32>,
    %c0_i32_8 = arith.constant 0 : i32
    %9 = arith.cmpi eq, %arg2, %c0_i32_8 : i32
    %10 = arith.extui %9 : i1 to i32
    %c0_i32_9 = arith.constant 0 : i32
    %11 = arith.cmpi ne, %10, %c0_i32_9 : i32
    scf.if %11 {
      %c0_10 = arith.constant 0 : index
      %c0_11 = arith.constant 0 : index
      %12 = vector.load %arg6[%c0_10, %c0_11] : memref<16x64xf32, #tpu.memory_space<vmem>>, vector<16x64xf32>
      %c0_12 = arith.constant 0 : index
      %c0_13 = arith.constant 0 : index
      %13 = vector.load %arg5[%c0_12, %c0_13] : memref<16x64xf32, #tpu.memory_space<vmem>>, vector<16x64xf32>
      tpu.vector_store %arg5[%c0_12, %c0_13], %12 {strides = array<i32>} : memref<16x64xf32, #tpu.memory_space<vmem>>, vector<16x64xf32>,
    } else {
    }
    return
  }
  func.func @transform_0(%arg0: i32, %arg1: i32, %arg2: i32) -> (i32, i32) {
    %c0_i32 = arith.constant 0 : i32
    return %arg0, %arg2 : i32, i32
  }
  func.func @transform_1(%arg0: i32, %arg1: i32, %arg2: i32) -> (i32, i32) {
    %c0_i32 = arith.constant 0 : i32
    return %arg2, %arg1 : i32, i32
  }
  func.func @transform_2(%arg0: i32, %arg1: i32, %arg2: i32) -> (i32, i32) {
    %c0_i32 = arith.constant 0 : i32
    return %arg0, %arg1 : i32, i32
  }
}

</mosaic_0001>

<llo_original>
// kernel: decode.17
$region0: #{decode.17}
  #allocation0 [shape = 'u32[]', space=smem, size = 0x4, offset = 0x4, fixed_abs, tag = 'smem constant byte address 0x4 - core index']
  #allocation1 [shape = 'u32[72,128]{1,0:T(1,128)}', space=vmem, size = 0x9000, scoped, tag = 'internal scratch']
  #allocation2 [shape = 'f32[16,96]{1,0:T(8,128)}', space=vmem, size = 0x2000, scoped, tag = 'scratch operand']
  %s0 = inlined_call_operand.vmem [shape: bf16[16,32], index: 0, kind: input, shape index: {}]
  %s1 = inlined_call_operand.vmem [shape: bf16[32,96], index: 1, kind: input, shape index: {}]
  %s2 = inlined_call_operand.vmem [shape: bf16[16,96], index: 2, kind: output, shape index: {}]
  %s3 = sld [smem:[#allocation0]]
  $region26: #{decode.17} parent=0
    _
  %s5 = ssub.s32 1, %s3
  %s6 = scalar_select 0, %s5, %s3
  // Predicated region
  $region2: #{decode.17} parent=0 // pred_check
    _
  $region3: #{decode.17} parent=0 // pred_check_branch
    %8 = sbr.rel (0) target = $region5
  $region4: #{decode.17} parent=0 // pred_region
    _
  $region5: #{decode.17} parent=0 // pred_fallthru
    _
  // Predicated region
  $region6: #{decode.17} parent=0 // pred_check
    _
  $region7: #{decode.17} parent=0 // pred_check_branch
    %10 = sbr.rel (0) target = $region9
  $region8: #{decode.17} parent=0 // pred_region
    _
  $region9: #{decode.17} parent=0 // pred_fallthru
    _
  %p12 = scmp.eq.s32.totalorder 0, 0
  // Predicated region
  $region10: #{decode.17} parent=0 // pred_check
    %p13 = pneg %p12
  $region11: #{decode.17} parent=0 // pred_check_branch
    %15 = sbr.rel (%p13) target = $region13
  $region12: #{decode.17} parent=0 // pred_region
    %vm16 = vcmask 785408
    %17 = vst.msk [vmem:[#allocation2] sm:$0xff] %vm16, 0.0
    %18 = vst.msk [vmem:[#allocation2 + $0x8] sm:$0xff] %vm16, 0.0
  $region13: #{decode.17} parent=0 // pred_fallthru
    _
  %v19 = vld [vmem:[#allocation2] sm:$0xff]
  %v20 = vld [vmem:[#allocation2 + $0x8] sm:$0xff]
  %v21 = vld [vmem:[%s0] sm:$0xf]
  %v22 = vld [vmem:[%s0 + $0x4] sm:$0xf]
  %v23 = vld [vmem:[%s1] sm:$0xf]
  %v24 = vld [vmem:[%s1 + $0x4] sm:$0xf]
  %v25 = vld [vmem:[%s1 + $0x8] sm:$0xf]
  %v26 = vld [vmem:[%s1 + $0xc] sm:$0xf]
  %v29 = vunpack.c.l.b16 %v21
  %v30 = vunpack.c.l.b16 %v22
  %v31 = vpack.c.b16 %v30, %v29
  %v36 = vunpack.c.l.b16 %v23
  %v37 = vunpack.c.l.b16 %v24
  %v38 = vunpack.c.l.b16 %v25
  %v39 = vunpack.c.l.b16 %v26
  %v40 = vpack.c.b16 %v37, %v36
  %v41 = vpack.c.b16 %v39, %v38
  %vm44 = vcmask 261120
  %v46 = vsel %vm44, %v31, 0
  %48 = vmatpush.bf16.msra.mxu0 0
  %49 = vmatpush.bf16.msra.mxu0 0
  %50 = vmatpush.bf16.msra.mxu0 0
  %51 = vmatpush.bf16.msra.mxu0 0
  %52 = vmatpush.bf16.msra.mxu0 0
  %53 = vmatpush.bf16.msra.mxu0 0
  %54 = vmatpush.bf16.msra.mxu0 %v41
  %55 = vmatpush.bf16.msra.mxu0 %v40
  %56 = vmatmul.bf16.gmra.mxu0 %v46
  %v57 = vpop.f32.mrf.mxu0
  %v58 = vadd.f32 0.0, %v57
  %v59 = vpop.f32.mrf.mxu0
  %v60 = vadd.f32 0.0, %v59
  %61 = vdwg.mxu0
  %v62 = vadd.f32 %v19, %v58
  %v63 = vadd.f32 %v20, %v60
  %vm64 = vcmask 785408
  %65 = vst.msk [vmem:[#allocation2] sm:$0xff] %vm64, %v62
  %66 = vst.msk [vmem:[#allocation2 + $0x8] sm:$0xff] %vm64, %v63
  // Predicated region
  $region14: #{decode.17} parent=0 // pred_check
    %p67 = pneg %p12
  $region15: #{decode.17} parent=0 // pred_check_branch
    %69 = sbr.rel (%p67) target = $region17
  $region16: #{decode.17} parent=0 // pred_region
    %v70 = vld [vmem:[#allocation2] sm:$0xff]
    %v71 = vld [vmem:[#allocation2 + $0x8] sm:$0xff]
    %v72 = vpack.c.bf16 %v70, %v70
    %v73 = vpack.c.bf16 %v71, %v71
    %vm74 = vcmask 781312
    %75 = vst.msk [vmem:[%s2] sm:$0xf] %vm74, %v72
    %76 = vst.msk [vmem:[%s2 + $0x4] sm:$0xf] %vm74, %v73
  $region17: #{decode.17} parent=0 // pred_fallthru
    _
  // Predicated region
  $region18: #{decode.17} parent=0 // pred_check
    _
  $region19: #{decode.17} parent=0 // pred_check_branch
    %78 = sbr.rel (0) target = $region21
  $region20: #{decode.17} parent=0 // pred_region
    _
  $region21: #{decode.17} parent=0 // pred_fallthru
    _
  // Predicated region
  $region22: #{decode.17} parent=0 // pred_check
    _
  $region23: #{decode.17} parent=0 // pred_check_branch
    %80 = sbr.rel (0) target = $region25
  $region24: #{decode.17} parent=0 // pred_region
    _
  $region25: #{decode.17} parent=0 // pred_fallthru
    _

// kernel: decode.16
$region0: #{decode.16}
  #allocation0 [shape = 'u32[]', space=smem, size = 0x4, offset = 0x4, fixed_abs, tag = 'smem constant byte address 0x4 - core index']
  #allocation1 [shape = 'u32[72,128]{1,0:T(1,128)}', space=vmem, size = 0x9000, scoped, tag = 'internal scratch']
  %s0 = inlined_call_operand.vmem [shape: bf16[16,32], index: 0, kind: input, shape index: {}]
  %s1 = inlined_call_operand.vmem [shape: f32[1,32], index: 1, kind: input, shape index: {}]
  %s2 = inlined_call_operand.vmem [shape: bf16[16,32], index: 2, kind: output, shape index: {}]
  %s3 = sld [smem:[#allocation0]]
  $region18: #{decode.16} parent=0
    _
  %s5 = ssub.s32 1, %s3
  %s6 = scalar_select 0, %s5, %s3
  // Predicated region
  $region2: #{decode.16} parent=0 // pred_check
    _
  $region3: #{decode.16} parent=0 // pred_check_branch
    %8 = sbr.rel (0) target = $region5
  $region4: #{decode.16} parent=0 // pred_region
    _
  $region5: #{decode.16} parent=0 // pred_fallthru
    _
  // Predicated region
  $region6: #{decode.16} parent=0 // pred_check
    _
  $region7: #{decode.16} parent=0 // pred_check_branch
    %10 = sbr.rel (0) target = $region9
  $region8: #{decode.16} parent=0 // pred_region
    _
  $region9: #{decode.16} parent=0 // pred_fallthru
    _
  %v11 = vld [vmem:[%s0] sm:$0xf]
  %v12 = vld [vmem:[%s0 + $0x4] sm:$0xf]
  %v13 = vunpack.c.l.bf16 %v11
  %v14 = vunpack.c.l.bf16 %v12
  %v15 = vmul.f32 %v13, %v13
  %v16 = vmul.f32 %v14, %v14
  %vm17 = vcmask 261120
  %v18 = vsel %vm17, %v15, 0.0
  %19 = vadd.xlane.f32.xlu0 %v18
  %v20 = vpop.xlane.xlu0 %19
  %v21 = vsel %vm17, %v16, 0.0
  %22 = vadd.xlane.f32.xlu0 %v21
  %v23 = vpop.xlane.xlu0 %22
  %v24 = vrcp.pop 32.0
  %v25 = vmul.f32 32.0, %v24
  %v26 = vsub.f32 1.0, %v25
  %v27 = vmul.f32 %v24, %v26
  %v28 = vadd.f32 %v24, %v27
  %vm29 = vweird.f32 %v24
  %v30 = vsel %vm29, %v24, %v28
  %v31 = vmul.f32 %v20, %v30
  %v32 = vmul.f32 %v23, %v30
  %v33 = vadd.f32 %v31, 1e-05
  %v34 = vadd.f32 %v32, 1e-05
  %v35 = vrsqrt.pop %v33
  %v36 = vmul.f32 %v35, %v33
  %v37 = vmul.f32 %v36, %v35
  %v38 = vmul.f32 0.5, %v37
  %v39 = vsub.f32 1.5, %v38
  %v40 = vmul.f32 %v35, %v39
  %vm41 = vweird.f32 %v33
  %vm42 = vweird.f32 %v35
  %vm43 = vmor %vm41, %vm42
  %v44 = vsel %vm43, %v35, %v40
  %v45 = vrsqrt.pop %v34
  %v46 = vmul.f32 %v45, %v34
  %v47 = vmul.f32 %v46, %v45
  %v48 = vmul.f32 0.5, %v47
  %v49 = vsub.f32 1.5, %v48
  %v50 = vmul.f32 %v45, %v49
  %vm51 = vweird.f32 %v34
  %vm52 = vweird.f32 %v45
  %vm53 = vmor %vm51, %vm52
  %v54 = vsel %vm53, %v45, %v50
  %v55 = vmul.f32 %v13, %v44
  %v56 = vmul.f32 %v14, %v54
  %v57 = vld [vmem:[%s1] sm:$0x1]
  %v59 = vperm.slane %v57, 0
  %v61 = vmul.f32 %v55, %v59
  %v62 = vmul.f32 %v56, %v59
  %v63 = vpack.c.bf16 %v61, %v61
  %v64 = vpack.c.bf16 %v62, %v62
  %vm65 = vcmask 257024
  %66 = vst.msk [vmem:[%s2] sm:$0xf] %vm65, %v63
  %67 = vst.msk [vmem:[%s2 + $0x4] sm:$0xf] %vm65, %v64
  // Predicated region
  $region10: #{decode.16} parent=0 // pred_check
    _
  $region11: #{decode.16} parent=0 // pred_check_branch
    %69 = sbr.rel (0) target = $region13
  $region12: #{decode.16} parent=0 // pred_region
    _
  $region13: #{decode.16} parent=0 // pred_fallthru
    _
  // Predicated region
  $region14: #{decode.16} parent=0 // pred_check
    _
  $region15: #{decode.16} parent=0 // pred_check_branch
    %71 = sbr.rel (0) target = $region17
  $region16: #{decode.16} parent=0 // pred_region
    _
  $region17: #{decode.16} parent=0 // pred_fallthru
    _

// kernel: decode.18
$region0: #{decode.18}
  #allocation0 [shape = 'u32[]', space=smem, size = 0x4, offset = 0x4, fixed_abs, tag = 'smem constant byte address 0x4 - core index']
  #allocation1 [shape = 'u32[72,128]{1,0:T(1,128)}', space=vmem, size = 0x9000, scoped, tag = 'internal scratch']
  %s0 = inlined_call_operand.vmem [shape: bf16[8,8,8], index: 0, kind: input, shape index: {}]
  %s1 = inlined_call_operand.vmem [shape: bf16[8,8,8], index: 1, kind: input, shape index: {}]
  %s2 = inlined_call_operand.vmem [shape: f32[8,8], index: 2, kind: input, shape index: {}]
  %s3 = inlined_call_operand.vmem [shape: f32[8,8], index: 3, kind: input, shape index: {}]
  %s4 = inlined_call_operand.vmem [shape: f32[8,8], index: 4, kind: input, shape index: {}]
  %s5 = inlined_call_operand.vmem [shape: bf16[8,8,8], index: 5, kind: output, shape index: {0}]
  %s6 = inlined_call_operand.vmem [shape: bf16[8,8,8], index: 6, kind: output, shape index: {1}]
  %7 = xla_tuple %s5, %s6
  %s8 = sld [smem:[#allocation0]]
  $region61: #{decode.18} parent=0
    _
  %s10 = ssub.s32 1, %s8
  %s11 = scalar_select 0, %s10, %s8
  loop: start=0, step=1, limit=10
  $region2: #{decode.18} parent=0 // loop_pre_header
    _
  $region3: #{decode.18} parent=0 // loop_header
    %s13 = sphi 0, %s17
    %p14 = scmp.ge.s32.totalorder %s13, 10
    %s20 = sphi 0, %s32
    %s21 = sphi 0, %s28
    %s22 = sphi 0, %s20
    %s23 = sphi 0, %s21
    %s24 = sphi 0, %s22
    %s25 = sphi 0, %s23
    %s37 = sphi 0, %s39
    %s40 = sphi 0, %s37
    %s41 = sphi 0, %s40
    %s57 = sphi 0, %s41
    %s65 = sphi 0, %s67
    %s68 = sphi 0, %s65
    %s69 = sphi 0, %s68
    %s85 = sphi 0, %s69
    %s91 = sphi 0, %s93
    %s94 = sphi 0, %s91
    %s95 = sphi 0, %s94
    %s111 = sphi 0, %s95
    %s117 = sphi 0, %s119
    %s120 = sphi 0, %s117
    %s121 = sphi 0, %s120
    %s137 = sphi 0, %s121
    %s141 = sphi 0, %s141
    %s143 = sphi 0, %s141
    %s144 = sphi 0, %s143
    %s158 = sphi 0, %s144
    %s166 = sphi 0, %s168
    %s169 = sphi 0, %s166
    %s170 = sphi 0, %s169
    %s186 = sphi 0, %s170
    %s194 = sphi 0, %s196
    %s197 = sphi 0, %s194
    %s198 = sphi 0, %s197
    %s214 = sphi 0, %s198
  $region4: #{decode.18} parent=0 // loop_header_branch
    %16 = sbr.rel (%p14) target = $region8
  $region5: #{decode.18} parent=0 // loop_body
    %s18 = ssub.s32 %s13, 1
    %s19 = ssub.s32 %s13, 2
    %s26 = sadd.s32 1, %s21
    %p27 = scmp.ge.s32.totalorder %s26, 1
    %s28 = scalar_select %p27, 0, %s26
    %s29 = sadd.s32 1, %s20
    %s30 = scalar_select %p27, %s29, %s20
    %p31 = scmp.ge.s32.totalorder %s30, 8
    %s32 = scalar_select %p31, 0, %s30
    %s33 = ssub.s32 %s20, %s32
    %s34 = ssub.s32 %s21, %s28
    %s35 = sor.u32 %s33, %s34
    %p36 = scmp.eq.s32.totalorder %s35, 0
    %s38 = sadd.s32 %s37, 1
    %s39 = scalar_select %p36, %s37, %s38
    %p42 = pneg %p36
    %p43 = scmp.eq.s32.totalorder %s13, 7
    %p44 = por %p42, %p43
    %p45 = scmp.ne.s32.totalorder %s37, %s40
    %p46 = scmp.eq.s32.totalorder %s13, 0
    %p47 = por %p45, %p46
    %p48 = scmp.ne.s32.totalorder %s37, %s40
    %p49 = scmp.eq.s32.totalorder %s18, 7
    %p50 = por %p48, %p49
    %p51 = scmp.ne.s32.totalorder %s40, %s41
    %p52 = scmp.eq.s32.totalorder %s18, 0
    %p53 = por %p51, %p52
    %p54 = scmp.ne.s32.totalorder %s40, %s41
    %p55 = scmp.eq.s32.totalorder %s19, 7
    %p56 = por %p54, %p55
    %p58 = scmp.ne.s32.totalorder %s41, %s57
    %p59 = scmp.eq.s32.totalorder %s19, 0
    %p60 = por %p58, %p59
    %s61 = ssub.s32 %s20, %s32
    %s62 = ssub.s32 %s21, %s28
    %s63 = sor.u32 %s61, %s62
    %p64 = scmp.eq.s32.totalorder %s63, 0
    %s66 = sadd.s32 %s65, 1
    %s67 = scalar_select %p64, %s65, %s66
    %p70 = pneg %p64
    %p71 = scmp.eq.s32.totalorder %s13, 7
    %p72 = por %p70, %p71
    %p73 = scmp.ne.s32.totalorder %s65, %s68
    %p74 = scmp.eq.s32.totalorder %s13, 0
    %p75 = por %p73, %p74
    %p76 = scmp.ne.s32.totalorder %s65, %s68
    %p77 = scmp.eq.s32.totalorder %s18, 7
    %p78 = por %p76, %p77
    %p79 = scmp.ne.s32.totalorder %s68, %s69
    %p80 = scmp.eq.s32.totalorder %s18, 0
    %p81 = por %p79, %p80
    %p82 = scmp.ne.s32.totalorder %s68, %s69
    %p83 = scmp.eq.s32.totalorder %s19, 7
    %p84 = por %p82, %p83
    %p86 = scmp.ne.s32.totalorder %s69, %s85
    %p87 = scmp.eq.s32.totalorder %s19, 0
    %p88 = por %p86, %p87
    %s89 = ssub.s32 %s21, %s28
    %p90 = scmp.eq.s32.totalorder %s89, 0
    %s92 = sadd.s32 %s91, 1
    %s93 = scalar_select %p90, %s91, %s92
    %p96 = pneg %p90
    %p97 = scmp.eq.s32.totalorder %s13, 7
    %p98 = por %p96, %p97
    %p99 = scmp.ne.s32.totalorder %s91, %s94
    %p100 = scmp.eq.s32.totalorder %s13, 0
    %p101 = por %p99, %p100
    %p102 = scmp.ne.s32.totalorder %s91, %s94
    %p103 = scmp.eq.s32.totalorder %s18, 7
    %p104 = por %p102, %p103
    %p105 = scmp.ne.s32.totalorder %s94, %s95
    %p106 = scmp.eq.s32.totalorder %s18, 0
    %p107 = por %p105, %p106
    %p108 = scmp.ne.s32.totalorder %s94, %s95
    %p109 = scmp.eq.s32.totalorder %s19, 7
    %p110 = por %p108, %p109
    %p112 = scmp.ne.s32.totalorder %s95, %s111
    %p113 = scmp.eq.s32.totalorder %s19, 0
    %p114 = por %p112, %p113
    %s115 = ssub.s32 %s21, %s28
    %p116 = scmp.eq.s32.totalorder %s115, 0
    %s118 = sadd.s32 %s117, 1
    %s119 = scalar_select %p116, %s117, %s118
    %p122 = pneg %p116
    %p123 = scmp.eq.s32.totalorder %s13, 7
    %p124 = por %p122, %p123
    %p125 = scmp.ne.s32.totalorder %s117, %s120
    %p126 = scmp.eq.s32.totalorder %s13, 0
    %p127 = por %p125, %p126
    %p128 = scmp.ne.s32.totalorder %s117, %s120
    %p129 = scmp.eq.s32.totalorder %s18, 7
    %p130 = por %p128, %p129
    %p131 = scmp.ne.s32.totalorder %s120, %s121
    %p132 = scmp.eq.s32.totalorder %s18, 0
    %p133 = por %p131, %p132
    %p134 = scmp.ne.s32.totalorder %s120, %s121
    %p135 = scmp.eq.s32.totalorder %s19, 7
    %p136 = por %p134, %p135
    %p138 = scmp.ne.s32.totalorder %s121, %s137
    %p139 = scmp.eq.s32.totalorder %s19, 0
    %p140 = por %p138, %p139
    %s142 = sadd.s32 %s141, 1
    %p145 = scmp.eq.s32.totalorder %s13, 7
    %p146 = scmp.ne.s32.totalorder %s141, %s143
    %p147 = scmp.eq.s32.totalorder %s13, 0
    %p148 = por %p146, %p147
    %p149 = scmp.ne.s32.totalorder %s141, %s143
    %p150 = scmp.eq.s32.totalorder %s18, 7
    %p151 = por %p149, %p150
    %p152 = scmp.ne.s32.totalorder %s143, %s144
    %p153 = scmp.eq.s32.totalorder %s18, 0
    %p154 = por %p152, %p153
    %p155 = scmp.ne.s32.totalorder %s143, %s144
    %p156 = scmp.eq.s32.totalorder %s19, 7
    %p157 = por %p155, %p156
    %p159 = scmp.ne.s32.totalorder %s144, %s158
    %p160 = scmp.eq.s32.totalorder %s19, 0
    %p161 = por %p159, %p160
    %s162 = ssub.s32 %s20, %s32
    %s163 = ssub.s32 %s21, %s28
    %s164 = sor.u32 %s162, %s163
    %p165 = scmp.eq.s32.totalorder %s164, 0
    %s167 = sadd.s32 %s166, 1
    %s168 = scalar_select %p165, %s166, %s167
    %p171 = pneg %p165
    %p172 = scmp.eq.s32.totalorder %s13, 7
    %p173 = por %p171, %p172
    %p174 = scmp.ne.s32.totalorder %s166, %s169
    %p175 = scmp.eq.s32.totalorder %s13, 0
    %p176 = por %p174, %p175
    %p177 = scmp.ne.s32.totalorder %s166, %s169
    %p178 = scmp.eq.s32.totalorder %s18, 7
    %p179 = por %p177, %p178
    %p180 = scmp.ne.s32.totalorder %s169, %s170
    %p181 = scmp.eq.s32.totalorder %s18, 0
    %p182 = por %p180, %p181
    %p183 = scmp.ne.s32.totalorder %s169, %s170
    %p184 = scmp.eq.s32.totalorder %s19, 7
    %p185 = por %p183, %p184
    %p187 = scmp.ne.s32.totalorder %s170, %s186
    %p188 = scmp.eq.s32.totalorder %s19, 0
    %p189 = por %p187, %p188
    %s190 = ssub.s32 %s20, %s32
    %s191 = ssub.s32 %s21, %s28
    %s192 = sor.u32 %s190, %s191
    %p193 = scmp.eq.s32.totalorder %s192, 0
    %s195 = sadd.s32 %s194, 1
    %s196 = scalar_select %p193, %s194, %s195
    %p199 = pneg %p193
    %p200 = scmp.eq.s32.totalorder %s13, 7
    %p201 = por %p199, %p200
    %p202 = scmp.ne.s32.totalorder %s194, %s197
    %p203 = scmp.eq.s32.totalorder %s13, 0
    %p204 = por %p202, %p203
    %p205 = scmp.ne.s32.totalorder %s194, %s197
    %p206 = scmp.eq.s32.totalorder %s18, 7
    %p207 = por %p205, %p206
    %p208 = scmp.ne.s32.totalorder %s197, %s198
    %p209 = scmp.eq.s32.totalorder %s18, 0
    %p210 = por %p208, %p209
    %p211 = scmp.ne.s32.totalorder %s197, %s198
    %p212 = scmp.eq.s32.totalorder %s19, 7
    %p213 = por %p211, %p212
    %p215 = scmp.ne.s32.totalorder %s198, %s214
    %p216 = scmp.eq.s32.totalorder %s19, 0
    %p217 = por %p215, %p216
    %p218 = scmp.le.s32.totalorder 1, %s13
    %p219 = scmp.lt.s32.totalorder %s13, 9
    %p220 = pnand %p218, %p219
    %p221 = pneg %p220
    // Predicated region
    $region9: #{decode.18} parent=5 // pred_check
      _
    $region10: #{decode.18} parent=5 // pred_check_branch
      %223 = sbr.rel (%p220) target = $region12
    $region11: #{decode.18} parent=5 // pred_region
      %s224 = ssub.s32 %s13, 1
      // Predicated region
      $region13: #{decode.18} parent=11 // pred_check
        %p225 = pneg %p107
      $region14: #{decode.18} parent=11 // pred_check_branch
        %227 = sbr.rel (%p225) target = $region16
      $region15: #{decode.18} parent=11 // pred_region
        %p228 = scmp.lt.s32.totalorder %s23, 0
        %s229 = scalar_select %p228, %s23, 0
        %s230 = smul.addr %s229, 8
        %s231 = scalar_lea.vmem %s2, %s230
      $region16: #{decode.18} parent=11 // pred_fallthru
        _
      // Predicated region
      $region17: #{decode.18} parent=11 // pred_check
        %p232 = pneg %p133
      $region18: #{decode.18} parent=11 // pred_check_branch
        %234 = sbr.rel (%p232) target = $region20
      $region19: #{decode.18} parent=11 // pred_region
        %p235 = scmp.lt.s32.totalorder %s23, 0
        %s236 = scalar_select %p235, %s23, 0
        %s237 = smul.addr %s236, 8
        %s238 = scalar_lea.vmem %s3, %s237
      $region20: #{decode.18} parent=11 // pred_fallthru
        _
      // Predicated region
      $region21: #{decode.18} parent=11 // pred_check
        %p239 = pneg %p154
      $region22: #{decode.18} parent=11 // pred_check_branch
        %241 = sbr.rel (%p239) target = $region24
      $region23: #{decode.18} parent=11 // pred_region
        _
      $region24: #{decode.18} parent=11 // pred_fallthru
        _
    $region12: #{decode.18} parent=5 // pred_fallthru
      _
    %p242 = scmp.lt.s32.totalorder %s13, 8
    // Predicated region
    $region25: #{decode.18} parent=5 // pred_check
      %p243 = pneg %p242
    $region26: #{decode.18} parent=5 // pred_check_branch
      %245 = sbr.rel (%p243) target = $region28
    $region27: #{decode.18} parent=5 // pred_region
      // Predicated region
      $region29: #{decode.18} parent=27 // pred_check
        %p246 = pneg %p47
      $region30: #{decode.18} parent=27 // pred_check_branch
        %248 = sbr.rel (%p246) target = $region32
      $region31: #{decode.18} parent=27 // pred_region
        %p249 = scmp.lt.s32.totalorder %s20, 7
        %s250 = scalar_select %p249, %s20, 7
        %p251 = scmp.lt.s32.totalorder %s21, 0
        %s252 = scalar_select %p251, %s21, 0
        %s253 = sadd.s32 %s252, %s250
        %s254 = smul.addr %s253, 4
        %s255 = scalar_lea.vmem %s0, %s254
      $region32: #{decode.18} parent=27 // pred_fallthru
        _
      // Predicated region
      $region33: #{decode.18} parent=27 // pred_check
        %p256 = pneg %p75
      $region34: #{decode.18} parent=27 // pred_check_branch
        %258 = sbr.rel (%p256) target = $region36
      $region35: #{decode.18} parent=27 // pred_region
        %p259 = scmp.lt.s32.totalorder %s20, 7
        %s260 = scalar_select %p259, %s20, 7
        %p261 = scmp.lt.s32.totalorder %s21, 0
        %s262 = scalar_select %p261, %s21, 0
        %s263 = sadd.s32 %s262, %s260
        %s264 = smul.addr %s263, 4
        %s265 = scalar_lea.vmem %s1, %s264
      $region36: #{decode.18} parent=27 // pred_fallthru
        _
    $region28: #{decode.18} parent=5 // pred_fallthru
      _
    %p266 = scmp.le.s32.totalorder 1, %s13
    %p267 = scmp.lt.s32.totalorder %s13, 9
    %p268 = pnand %p266, %p267
    %p269 = pneg %p268
    // Predicated region
    $region37: #{decode.18} parent=5 // pred_check
      _
    $region38: #{decode.18} parent=5 // pred_check_branch
      %271 = sbr.rel (%p268) target = $region40
    $region39: #{decode.18} parent=5 // pred_region
      %s272 = ssub.s32 %s13, 1
      %p273 = scmp.lt.s32.totalorder %s22, 7
      %s274 = scalar_select %p273, %s22, 7
      %p275 = scmp.lt.s32.totalorder %s23, 0
      %s276 = scalar_select %p275, %s23, 0
      %s277 = sadd.s32 %s276, %s274
      %s278 = smul.addr %s277, 4
      %s279 = scalar_lea.vmem %s0, %s278
      %p280 = pneg %p53
      %p281 = pneg %p50
      %p282 = scmp.lt.s32.totalorder %s22, 7
      %s283 = scalar_select %p282, %s22, 7
      %p284 = scmp.lt.s32.totalorder %s23, 0
      %s285 = scalar_select %p284, %s23, 0
      %s286 = sadd.s32 %s285, %s283
      %s287 = smul.addr %s286, 4
      %s288 = scalar_lea.vmem %s1, %s287
      %p289 = pneg %p81
      %p290 = pneg %p78
      %p291 = scmp.lt.s32.totalorder %s23, 0
      %s292 = scalar_select %p291, %s23, 0
      %s293 = smul.addr %s292, 8
      %s294 = scalar_lea.vmem %s2, %s293
      %p295 = pneg %p107
      %p296 = pneg %p104
      %p297 = scmp.lt.s32.totalorder %s23, 0
      %s298 = scalar_select %p297, %s23, 0
      %s299 = smul.addr %s298, 8
      %s300 = scalar_lea.vmem %s3, %s299
      %p301 = pneg %p133
      %p302 = pneg %p130
      %p303 = pneg %p154
      %p304 = pneg %p151
      %p305 = pneg %p182
      %p306 = pneg %p179
      %p307 = scmp.lt.s32.totalorder %s22, 7
      %s308 = scalar_select %p307, %s22, 7
      %p309 = scmp.lt.s32.totalorder %s23, 0
      %s310 = scalar_select %p309, %s23, 0
      %s311 = sadd.s32 %s310, %s308
      %s312 = smul.addr %s311, 4
      %s313 = scalar_lea.vmem %s5, %s312
      %p314 = pneg %p210
      %p315 = pneg %p207
      %p316 = scmp.lt.s32.totalorder %s22, 7
      %s317 = scalar_select %p316, %s22, 7
      %p318 = scmp.lt.s32.totalorder %s23, 0
      %s319 = scalar_select %p318, %s23, 0
      %s320 = sadd.s32 %s319, %s317
      %s321 = smul.addr %s320, 4
      %s322 = scalar_lea.vmem %s6, %s321
      %p323 = scmp.lt.s32.totalorder %s22, 7
      %s324 = scalar_select %p323, %s22, 7
      %p325 = scmp.lt.s32.totalorder %s23, 0
      %s326 = scalar_select %p325, %s23, 0
      %s327 = sadd.s32 %s326, %s324
      %s328 = smul.addr %s327, 4
      %s329 = scalar_lea.vmem %s0, %s328
      %p330 = scmp.lt.s32.totalorder %s22, 7
      %s331 = scalar_select %p330, %s22, 7
      %p332 = scmp.lt.s32.totalorder %s23, 0
      %s333 = scalar_select %p332, %s23, 0
      %s334 = sadd.s32 %s333, %s331
      %s335 = smul.addr %s334, 4
      %s336 = scalar_lea.vmem %s1, %s335
      %p337 = scmp.lt.s32.totalorder %s23, 0
      %s338 = scalar_select %p337, %s23, 0
      %s339 = smul.addr %s338, 8
      %s340 = scalar_lea.vmem %s2, %s339
      %p341 = scmp.lt.s32.totalorder %s23, 0
      %s342 = scalar_select %p341, %s23, 0
      %s343 = smul.addr %s342, 8
      %s344 = scalar_lea.vmem %s3, %s343
      %p345 = scmp.lt.s32.totalorder %s22, 7
      %s346 = scalar_select %p345, %s22, 7
      %p347 = scmp.lt.s32.totalorder %s23, 0
      %s348 = scalar_select %p347, %s23, 0
      %s349 = sadd.s32 %s348, %s346
      %s350 = smul.addr %s349, 4
      %s351 = scalar_lea.vmem %s5, %s350
      %p352 = scmp.lt.s32.totalorder %s22, 7
      %s353 = scalar_select %p352, %s22, 7
      %p354 = scmp.lt.s32.totalorder %s23, 0
      %s355 = scalar_select %p354, %s23, 0
      %s356 = sadd.s32 %s355, %s353
      %s357 = smul.addr %s356, 4
      %s358 = scalar_lea.vmem %s6, %s357
      %v359 = vld [vmem:[%s340] sm:$0xff]
      %v360 = vld [vmem:[%s344] sm:$0xff]
      %v361 = vld [vmem:[%s4] sm:$0xff]
      %v362 = vld [vmem:[%s329] sm:$0xf]
      %v363 = vunpack.c.l.bf16 %v362
      %v364 = vmul.f32 %v363, %v359
      %vm365 = vcmask 64512
      %v367 = vsel %vm365, %v363, 0
      %369 = vmatpush.msra.mxu0 0.0
      %370 = vmatpush.msra.mxu0 0.0
      %371 = vmatpush.msra.mxu0 0.0
      %372 = vmatpush.msra.mxu0 0.0
      %373 = vmatpush.msra.mxu0 0.0
      %374 = vmatpush.msra.mxu0 0.0
      %375 = vmatpush.msra.mxu0 0.0
      %376 = vmatpush.msra.mxu0 0.0
      %377 = vmatpush.msra.mxu0 0.0
      %378 = vmatpush.msra.mxu0 0.0
      %379 = vmatpush.msra.mxu0 0.0
      %380 = vmatpush.msra.mxu0 0.0
      %381 = vmatpush.msra.mxu0 0.0
      %382 = vmatpush.msra.mxu0 0.0
      %383 = vmatpush.msra.mxu0 0.0
      %384 = vmatpush.msra.mxu0 %v361
      %385 = vmatmul.f32.gmra.mxu0 %v367
      %v386 = vpop.f32.mrf.mxu0
      %v387 = vadd.f32 0.0, %v386
      %388 = vdwg.mxu0
      %v389 = vmul.f32 %v387, %v360
      %v390 = vadd.f32 %v364, %v389
      %v391 = vmul.f32 %v390, 0.35355338
      %v392 = vpack.c.bf16 %v391, %v391
      %vm393 = vcmask 60416
      %394 = vst.msk [vmem:[%s351] sm:$0xf] %vm393, %v392
      %v395 = vld [vmem:[%s336] sm:$0xf]
      %v396 = vunpack.c.l.bf16 %v395
      %v397 = vmul.f32 %v396, %v359
      %v399 = vsel %vm365, %v396, 0
      %401 = vmatpush.msra.mxu0 0.0
      %402 = vmatpush.msra.mxu0 0.0
      %403 = vmatpush.msra.mxu0 0.0
      %404 = vmatpush.msra.mxu0 0.0
      %405 = vmatpush.msra.mxu0 0.0
      %406 = vmatpush.msra.mxu0 0.0
      %407 = vmatpush.msra.mxu0 0.0
      %408 = vmatpush.msra.mxu0 0.0
      %409 = vmatpush.msra.mxu0 0.0
      %410 = vmatpush.msra.mxu0 0.0
      %411 = vmatpush.msra.mxu0 0.0
      %412 = vmatpush.msra.mxu0 0.0
      %413 = vmatpush.msra.mxu0 0.0
      %414 = vmatpush.msra.mxu0 0.0
      %415 = vmatpush.msra.mxu0 0.0
      %416 = vmatpush.msra.mxu0 %v361
      %417 = vmatmul.f32.gmra.mxu0 %v399
      %v418 = vpop.f32.mrf.mxu0
      %v419 = vadd.f32 0.0, %v418
      %420 = vdwg.mxu0
      %v421 = vmul.f32 %v419, %v360
      %v422 = vadd.f32 %v397, %v421
      %v423 = vpack.c.bf16 %v422, %v422
      %424 = vst.msk [vmem:[%s358] sm:$0xf] %vm393, %v423
      %p425 = scmp.lt.s32.totalorder %s22, 7
      %s426 = scalar_select %p425, %s22, 7
      %p427 = scmp.lt.s32.totalorder %s23, 0
      %s428 = scalar_select %p427, %s23, 0
      %s429 = sadd.s32 %s428, %s426
      %s430 = smul.addr %s429, 4
      %s431 = scalar_lea.vmem %s5, %s430
      %p432 = scmp.lt.s32.totalorder %s22, 7
      %s433 = scalar_select %p432, %s22, 7
      %p434 = scmp.lt.s32.totalorder %s23, 0
      %s435 = scalar_select %p434, %s23, 0
      %s436 = sadd.s32 %s435, %s433
      %s437 = smul.addr %s436, 4
      %s438 = scalar_lea.vmem %s6, %s437
      // Predicated region
      $region41: #{decode.18} parent=39 // pred_check
        %p439 = pneg %p179
      $region42: #{decode.18} parent=39 // pred_check_branch
        %441 = sbr.rel (%p439) target = $region44
      $region43: #{decode.18} parent=39 // pred_region
        _
      $region44: #{decode.18} parent=39 // pred_fallthru
        _
      // Predicated region
      $region45: #{decode.18} parent=39 // pred_check
        %p442 = pneg %p207
      $region46: #{decode.18} parent=39 // pred_check_branch
        %444 = sbr.rel (%p442) target = $region48
      $region47: #{decode.18} parent=39 // pred_region
        _
      $region48: #{decode.18} parent=39 // pred_fallthru
        _
    $region40: #{decode.18} parent=5 // pred_fallthru
      _
    %p445 = scmp.le.s32.totalorder 2, %s13
    // Predicated region
    $region49: #{decode.18} parent=5 // pred_check
      %p446 = pneg %p445
    $region50: #{decode.18} parent=5 // pred_check_branch
      %448 = sbr.rel (%p446) target = $region52
    $region51: #{decode.18} parent=5 // pred_region
      %s449 = ssub.s32 %s13, 2
      // Predicated region
      $region53: #{decode.18} parent=51 // pred_check
        %p450 = pneg %p185
      $region54: #{decode.18} parent=51 // pred_check_branch
        %452 = sbr.rel (%p450) target = $region56
      $region55: #{decode.18} parent=51 // pred_region
        %p453 = scmp.lt.s32.totalorder %s24, 7
        %s454 = scalar_select %p453, %s24, 7
        %p455 = scmp.lt.s32.totalorder %s25, 0
        %s456 = scalar_select %p455, %s25, 0
        %s457 = sadd.s32 %s456, %s454
        %s458 = smul.addr %s457, 4
        %s459 = scalar_lea.vmem %s5, %s458
      $region56: #{decode.18} parent=51 // pred_fallthru
        _
      // Predicated region
      $region57: #{decode.18} parent=51 // pred_check
        %p460 = pneg %p213
      $region58: #{decode.18} parent=51 // pred_check_branch
        %462 = sbr.rel (%p460) target = $region60
      $region59: #{decode.18} parent=51 // pred_region
        %p463 = scmp.lt.s32.totalorder %s24, 7
        %s464 = scalar_select %p463, %s24, 7
        %p465 = scmp.lt.s32.totalorder %s25, 0
        %s466 = scalar_select %p465, %s25, 0
        %s467 = sadd.s32 %s466, %s464
        %s468 = smul.addr %s467, 4
        %s469 = scalar_lea.vmem %s6, %s468
      $region60: #{decode.18} parent=51 // pred_fallthru
        _
    $region52: #{decode.18} parent=5 // pred_fallthru
      _
  $region6: #{decode.18} parent=0 // loop_footer
    %s17 = sadd.s32 1, %s13
  $region7: #{decode.18} parent=0 // loop_footer_branch
    %12 = sbr.rel target = $region3
  $region8: #{decode.18} parent=0 // loop_exit
    _

// kernel: decode.19
$region0: #{decode.19}
  #allocation0 [shape = 'u32[]', space=smem, size = 0x4, offset = 0x4, fixed_abs, tag = 'smem constant byte address 0x4 - core index']
  #allocation1 [shape = 'u32[72,128]{1,0:T(1,128)}', space=vmem, size = 0x9000, scoped, tag = 'internal scratch']
  #allocation2 [shape = 'f32[8,1]{1,0:T(8,128)}', space=vmem, size = 0x1000, scoped, tag = 'scratch operand']
  #allocation3 [shape = 'f32[8,1]{1,0:T(8,128)}', space=vmem, size = 0x1000, scoped, tag = 'scratch operand']
  #allocation4 [shape = 'f32[8,8]{1,0:T(8,128)}', space=vmem, size = 0x1000, scoped, tag = 'scratch operand']
  %s0 = inlined_call_operand.vmem [shape: bf16[8,8,8], index: 0, kind: input, shape index: {}]
  %s1 = inlined_call_operand.vmem [shape: bf16[8,8,8], index: 1, kind: input, shape index: {}]
  %s2 = inlined_call_operand.vmem [shape: bf16[8,8,8], index: 2, kind: input, shape index: {}]
  %s3 = inlined_call_operand.vmem [shape: bf16[8,8,8], index: 3, kind: output, shape index: {}]
  %s4 = sld [smem:[#allocation0]]
  $region57: #{decode.19} parent=0
    _
  %s6 = ssub.s32 1, %s4
  %s7 = scalar_select 0, %s6, %s4
  loop: start=0, step=1, limit=10
  $region2: #{decode.19} parent=0 // loop_pre_header
    _
  $region3: #{decode.19} parent=0 // loop_header
    %s9 = sphi 0, %s13
    %p10 = scmp.ge.s32.totalorder %s9, 10
    %s16 = sphi 0, %s35
    %s17 = sphi 0, %s31
    %s18 = sphi 0, %s27
    %s19 = sphi 0, %s16
    %s20 = sphi 0, %s17
    %s21 = sphi 0, %s18
    %s22 = sphi 0, %s19
    %s23 = sphi 0, %s20
    %s24 = sphi 0, %s21
    %s40 = sphi 0, %s42
    %s43 = sphi 0, %s40
    %s44 = sphi 0, %s43
    %s60 = sphi 0, %s44
    %s68 = sphi 0, %s70
    %s71 = sphi 0, %s68
    %s72 = sphi 0, %s71
    %s88 = sphi 0, %s72
    %s96 = sphi 0, %s98
    %s99 = sphi 0, %s96
    %s100 = sphi 0, %s99
    %s116 = sphi 0, %s100
    %s124 = sphi 0, %s126
    %s127 = sphi 0, %s124
    %s128 = sphi 0, %s127
    %s144 = sphi 0, %s128
  $region4: #{decode.19} parent=0 // loop_header_branch
    %12 = sbr.rel (%p10) target = $region8
  $region5: #{decode.19} parent=0 // loop_body
    %s14 = ssub.s32 %s9, 1
    %s15 = ssub.s32 %s9, 2
    %s25 = sadd.s32 1, %s18
    %p26 = scmp.ge.s32.totalorder %s25, 1
    %s27 = scalar_select %p26, 0, %s25
    %s28 = sadd.s32 1, %s17
    %s29 = scalar_select %p26, %s28, %s17
    %p30 = scmp.ge.s32.totalorder %s29, 1
    %s31 = scalar_select %p30, 0, %s29
    %s32 = sadd.s32 1, %s16
    %s33 = scalar_select %p30, %s32, %s16
    %p34 = scmp.ge.s32.totalorder %s33, 8
    %s35 = scalar_select %p34, 0, %s33
    %s36 = ssub.s32 %s16, %s35
    %s37 = ssub.s32 %s17, %s31
    %s38 = sor.u32 %s36, %s37
    %p39 = scmp.eq.s32.totalorder %s38, 0
    %s41 = sadd.s32 %s40, 1
    %s42 = scalar_select %p39, %s40, %s41
    %p45 = pneg %p39
    %p46 = scmp.eq.s32.totalorder %s9, 7
    %p47 = por %p45, %p46
    %p48 = scmp.ne.s32.totalorder %s40, %s43
    %p49 = scmp.eq.s32.totalorder %s9, 0
    %p50 = por %p48, %p49
    %p51 = scmp.ne.s32.totalorder %s40, %s43
    %p52 = scmp.eq.s32.totalorder %s14, 7
    %p53 = por %p51, %p52
    %p54 = scmp.ne.s32.totalorder %s43, %s44
    %p55 = scmp.eq.s32.totalorder %s14, 0
    %p56 = por %p54, %p55
    %p57 = scmp.ne.s32.totalorder %s43, %s44
    %p58 = scmp.eq.s32.totalorder %s15, 7
    %p59 = por %p57, %p58
    %p61 = scmp.ne.s32.totalorder %s44, %s60
    %p62 = scmp.eq.s32.totalorder %s15, 0
    %p63 = por %p61, %p62
    %s64 = ssub.s32 %s16, %s35
    %s65 = ssub.s32 %s18, %s27
    %s66 = sor.u32 %s64, %s65
    %p67 = scmp.eq.s32.totalorder %s66, 0
    %s69 = sadd.s32 %s68, 1
    %s70 = scalar_select %p67, %s68, %s69
    %p73 = pneg %p67
    %p74 = scmp.eq.s32.totalorder %s9, 7
    %p75 = por %p73, %p74
    %p76 = scmp.ne.s32.totalorder %s68, %s71
    %p77 = scmp.eq.s32.totalorder %s9, 0
    %p78 = por %p76, %p77
    %p79 = scmp.ne.s32.totalorder %s68, %s71
    %p80 = scmp.eq.s32.totalorder %s14, 7
    %p81 = por %p79, %p80
    %p82 = scmp.ne.s32.totalorder %s71, %s72
    %p83 = scmp.eq.s32.totalorder %s14, 0
    %p84 = por %p82, %p83
    %p85 = scmp.ne.s32.totalorder %s71, %s72
    %p86 = scmp.eq.s32.totalorder %s15, 7
    %p87 = por %p85, %p86
    %p89 = scmp.ne.s32.totalorder %s72, %s88
    %p90 = scmp.eq.s32.totalorder %s15, 0
    %p91 = por %p89, %p90
    %s92 = ssub.s32 %s16, %s35
    %s93 = ssub.s32 %s18, %s27
    %s94 = sor.u32 %s92, %s93
    %p95 = scmp.eq.s32.totalorder %s94, 0
    %s97 = sadd.s32 %s96, 1
    %s98 = scalar_select %p95, %s96, %s97
    %p101 = pneg %p95
    %p102 = scmp.eq.s32.totalorder %s9, 7
    %p103 = por %p101, %p102
    %p104 = scmp.ne.s32.totalorder %s96, %s99
    %p105 = scmp.eq.s32.totalorder %s9, 0
    %p106 = por %p104, %p105
    %p107 = scmp.ne.s32.totalorder %s96, %s99
    %p108 = scmp.eq.s32.totalorder %s14, 7
    %p109 = por %p107, %p108
    %p110 = scmp.ne.s32.totalorder %s99, %s100
    %p111 = scmp.eq.s32.totalorder %s14, 0
    %p112 = por %p110, %p111
    %p113 = scmp.ne.s32.totalorder %s99, %s100
    %p114 = scmp.eq.s32.totalorder %s15, 7
    %p115 = por %p113, %p114
    %p117 = scmp.ne.s32.totalorder %s100, %s116
    %p118 = scmp.eq.s32.totalorder %s15, 0
    %p119 = por %p117, %p118
    %s120 = ssub.s32 %s16, %s35
    %s121 = ssub.s32 %s17, %s31
    %s122 = sor.u32 %s120, %s121
    %p123 = scmp.eq.s32.totalorder %s122, 0
    %s125 = sadd.s32 %s124, 1
    %s126 = scalar_select %p123, %s124, %s125
    %p129 = pneg %p123
    %p130 = scmp.eq.s32.totalorder %s9, 7
    %p131 = por %p129, %p130
    %p132 = scmp.ne.s32.totalorder %s124, %s127
    %p133 = scmp.eq.s32.totalorder %s9, 0
    %p134 = por %p132, %p133
    %p135 = scmp.ne.s32.totalorder %s124, %s127
    %p136 = scmp.eq.s32.totalorder %s14, 7
    %p137 = por %p135, %p136
    %p138 = scmp.ne.s32.totalorder %s127, %s128
    %p139 = scmp.eq.s32.totalorder %s14, 0
    %p140 = por %p138, %p139
    %p141 = scmp.ne.s32.totalorder %s127, %s128
    %p142 = scmp.eq.s32.totalorder %s15, 7
    %p143 = por %p141, %p142
    %p145 = scmp.ne.s32.totalorder %s128, %s144
    %p146 = scmp.eq.s32.totalorder %s15, 0
    %p147 = por %p145, %p146
    %p148 = scmp.le.s32.totalorder 1, %s9
    %p149 = scmp.lt.s32.totalorder %s9, 9
    %p150 = pnand %p148, %p149
    %p151 = pneg %p150
    // Predicated region
    $region9: #{decode.19} parent=5 // pred_check
      _
    $region10: #{decode.19} parent=5 // pred_check_branch
      %153 = sbr.rel (%p150) target = $region12
    $region11: #{decode.19} parent=5 // pred_region
      %s154 = ssub.s32 %s9, 1
    $region12: #{decode.19} parent=5 // pred_fallthru
      _
    %p155 = scmp.lt.s32.totalorder %s9, 8
    // Predicated region
    $region13: #{decode.19} parent=5 // pred_check
      %p156 = pneg %p155
    $region14: #{decode.19} parent=5 // pred_check_branch
      %158 = sbr.rel (%p156) target = $region16
    $region15: #{decode.19} parent=5 // pred_region
      // Predicated region
      $region17: #{decode.19} parent=15 // pred_check
        %p159 = pneg %p50
      $region18: #{decode.19} parent=15 // pred_check_branch
        %161 = sbr.rel (%p159) target = $region20
      $region19: #{decode.19} parent=15 // pred_region
        %p162 = scmp.lt.s32.totalorder %s16, 7
        %s163 = scalar_select %p162, %s16, 7
        %p164 = scmp.lt.s32.totalorder %s17, 0
        %s165 = scalar_select %p164, %s17, 0
        %s166 = sadd.s32 %s165, %s163
        %s167 = smul.addr %s166, 4
        %s168 = scalar_lea.vmem %s0, %s167
      $region20: #{decode.19} parent=15 // pred_fallthru
        _
      // Predicated region
      $region21: #{decode.19} parent=15 // pred_check
        %p169 = pneg %p78
      $region22: #{decode.19} parent=15 // pred_check_branch
        %171 = sbr.rel (%p169) target = $region24
      $region23: #{decode.19} parent=15 // pred_region
        %p172 = scmp.lt.s32.totalorder %s16, 7
        %s173 = scalar_select %p172, %s16, 7
        %p174 = scmp.lt.s32.totalorder %s18, 0
        %s175 = scalar_select %p174, %s18, 0
        %s176 = sadd.s32 %s175, %s173
        %s177 = smul.addr %s176, 4
        %s178 = scalar_lea.vmem %s1, %s177
      $region24: #{decode.19} parent=15 // pred_fallthru
        _
      // Predicated region
      $region25: #{decode.19} parent=15 // pred_check
        %p179 = pneg %p106
      $region26: #{decode.19} parent=15 // pred_check_branch
        %181 = sbr.rel (%p179) target = $region28
      $region27: #{decode.19} parent=15 // pred_region
        %p182 = scmp.lt.s32.totalorder %s16, 7
        %s183 = scalar_select %p182, %s16, 7
        %p184 = scmp.lt.s32.totalorder %s18, 0
        %s185 = scalar_select %p184, %s18, 0
        %s186 = sadd.s32 %s185, %s183
        %s187 = smul.addr %s186, 4
        %s188 = scalar_lea.vmem %s2, %s187
      $region28: #{decode.19} parent=15 // pred_fallthru
        _
    $region16: #{decode.19} parent=5 // pred_fallthru
      _
    %p189 = scmp.le.s32.totalorder 1, %s9
    %p190 = scmp.lt.s32.totalorder %s9, 9
    %p191 = pnand %p189, %p190
    %p192 = pneg %p191
    // Predicated region
    $region29: #{decode.19} parent=5 // pred_check
      _
    $region30: #{decode.19} parent=5 // pred_check_branch
      %194 = sbr.rel (%p191) target = $region32
    $region31: #{decode.19} parent=5 // pred_region
      %s195 = ssub.s32 %s9, 1
      %p196 = scmp.lt.s32.totalorder %s19, 7
      %s197 = scalar_select %p196, %s19, 7
      %p198 = scmp.lt.s32.totalorder %s20, 0
      %s199 = scalar_select %p198, %s20, 0
      %s200 = sadd.s32 %s199, %s197
      %s201 = smul.addr %s200, 4
      %s202 = scalar_lea.vmem %s0, %s201
      %p203 = pneg %p56
      %p204 = pneg %p53
      %p205 = scmp.lt.s32.totalorder %s19, 7
      %s206 = scalar_select %p205, %s19, 7
      %p207 = scmp.lt.s32.totalorder %s21, 0
      %s208 = scalar_select %p207, %s21, 0
      %s209 = sadd.s32 %s208, %s206
      %s210 = smul.addr %s209, 4
      %s211 = scalar_lea.vmem %s1, %s210
      %p212 = pneg %p84
      %p213 = pneg %p81
      %p214 = scmp.lt.s32.totalorder %s19, 7
      %s215 = scalar_select %p214, %s19, 7
      %p216 = scmp.lt.s32.totalorder %s21, 0
      %s217 = scalar_select %p216, %s21, 0
      %s218 = sadd.s32 %s217, %s215
      %s219 = smul.addr %s218, 4
      %s220 = scalar_lea.vmem %s2, %s219
      %p221 = pneg %p112
      %p222 = pneg %p109
      %p223 = pneg %p140
      %p224 = pneg %p137
      %p225 = scmp.lt.s32.totalorder %s19, 7
      %s226 = scalar_select %p225, %s19, 7
      %p227 = scmp.lt.s32.totalorder %s20, 0
      %s228 = scalar_select %p227, %s20, 0
      %s229 = sadd.s32 %s228, %s226
      %s230 = smul.addr %s229, 4
      %s231 = scalar_lea.vmem %s3, %s230
      %p232 = scmp.lt.s32.totalorder %s19, 7
      %s233 = scalar_select %p232, %s19, 7
      %p234 = scmp.lt.s32.totalorder %s20, 0
      %s235 = scalar_select %p234, %s20, 0
      %s236 = sadd.s32 %s235, %s233
      %s237 = smul.addr %s236, 4
      %s238 = scalar_lea.vmem %s0, %s237
      %p239 = scmp.lt.s32.totalorder %s19, 7
      %s240 = scalar_select %p239, %s19, 7
      %p241 = scmp.lt.s32.totalorder %s21, 0
      %s242 = scalar_select %p241, %s21, 0
      %s243 = sadd.s32 %s242, %s240
      %s244 = smul.addr %s243, 4
      %s245 = scalar_lea.vmem %s1, %s244
      %p246 = scmp.lt.s32.totalorder %s19, 7
      %s247 = scalar_select %p246, %s19, 7
      %p248 = scmp.lt.s32.totalorder %s21, 0
      %s249 = scalar_select %p248, %s21, 0
      %s250 = sadd.s32 %s249, %s247
      %s251 = smul.addr %s250, 4
      %s252 = scalar_lea.vmem %s2, %s251
      %p253 = scmp.lt.s32.totalorder %s19, 7
      %s254 = scalar_select %p253, %s19, 7
      %p255 = scmp.lt.s32.totalorder %s20, 0
      %s256 = scalar_select %p255, %s20, 0
      %s257 = sadd.s32 %s256, %s254
      %s258 = smul.addr %s257, 4
      %s259 = scalar_lea.vmem %s3, %s258
      %p261 = scmp.eq.s32.totalorder %s21, 0
      // Predicated region
      $region33: #{decode.19} parent=31 // pred_check
        %p262 = pneg %p261
      $region34: #{decode.19} parent=31 // pred_check_branch
        %264 = sbr.rel (%p262) target = $region36
      $region35: #{decode.19} parent=31 // pred_region
        %vm265 = vcmask 7168
        %266 = vst.msk [vmem:[#allocation2] sm:$0xff] %vm265, -inf
        %267 = vst.msk [vmem:[#allocation3] sm:$0xff] %vm265, 0.0
        %vm268 = vcmask 64512
        %269 = vst.msk [vmem:[#allocation4] sm:$0xff] %vm268, 0.0
      $region36: #{decode.19} parent=31 // pred_fallthru
        _
      %s270 = smul.u32 %s20, 8
      %s271 = smul.u32 %s21, 8
      %s272 = sadd.s32 %s270, 7
      %p273 = scmp.le.s32.totalorder %s271, %s272
      // Predicated region
      $region37: #{decode.19} parent=31 // pred_check
        %p274 = pneg %p273
      $region38: #{decode.19} parent=31 // pred_check_branch
        %276 = sbr.rel (%p274) target = $region40
      $region39: #{decode.19} parent=31 // pred_region
        %v277 = vld [vmem:[%s238] sm:$0xf]
        %v278 = vld [vmem:[%s245] sm:$0xf]
        %v279 = vld [vmem:[%s252] sm:$0xf]
        %vm280 = vcmask 64512
        %v282 = vsel %vm280, %v277, 0
        %v285 = vsel %vm280, %v278, 0
        %287 = vmatpush.bf16.xpose.msra.mxu0 0
        %288 = vmatpush.bf16.xpose.msra.mxu0 0
        %289 = vmatpush.bf16.xpose.msra.mxu0 0
        %290 = vmatpush.bf16.xpose.msra.mxu0 0
        %291 = vmatpush.bf16.xpose.msra.mxu0 0
        %292 = vmatpush.bf16.xpose.msra.mxu0 0
        %293 = vmatpush.bf16.xpose.msra.mxu0 0
        %294 = vmatpush.bf16.xpose.msra.mxu0 %v285
        %295 = vmatmul.bf16.gmra.mxu0 %v282
        %v296 = vpop.f32.mrf.mxu0
        %v297 = vadd.f32 0.0, %v296
        %v298 = vpop.f32.mrf.mxu0
        %299 = vdwg.mxu0
        %v300 = vlaneseq
        %v301 = vshrl.u32 %v300, 7
        %v302 = vstv %s270
        %v303 = vadd.s32 %v302, %v301
        %v304 = vlaneseq
        %v305 = vand.u32 %v304, 127
        %v306 = vstv %s271
        %v307 = vadd.s32 %v306, %v305
        %vm308 = vcmp.le.s32.totalorder %v307, %v303
        %v309 = vsel %vm308, %v297, -inf
        %v310 = vld [vmem:[#allocation2] sm:$0xff]
        %v311 = vsel %vm280, %v309, -inf
        %312 = vmax.xlane.f32.xlu0 %v311
        %v313 = vpop.xlane.xlu0 %312
        %v314 = vmax.f32 %v310, %v313
        %v315 = vsub.f32 %v310, %v314
        %v316 = vmul.f32 %v315, 1.442695
        %v317 = vpow.pop %v316
        %319 = vset.pattern.permute.xlu0 0
        %320 = vperm.xlu0 %319, %v314
        %v321 = vpop.permute.xlu0 %320
        %v323 = vsub.f32 %v309, %v321
        %v324 = vmul.f32 %v323, 1.442695
        %v325 = vpow.pop %v324
        %v326 = vld [vmem:[#allocation3] sm:$0xff]
        %v327 = vmul.f32 %v317, %v326
        %v328 = vsel %vm280, %v325, 0.0
        %329 = vadd.xlane.f32.xlu0 %v328
        %v330 = vpop.xlane.xlu0 %329
        %v331 = vadd.f32 %v327, %v330
        %vm332 = vcmask 7168
        %333 = vst.msk [vmem:[#allocation3] sm:$0xff] %vm332, %v331
        %v334 = vld [vmem:[#allocation4] sm:$0xff]
        %336 = vset.pattern.permute.xlu0 0
        %337 = vperm.xlu0 %336, %v317
        %v338 = vpop.permute.xlu0 %337
        %v340 = vmul.f32 %v338, %v334
        %v341 = vpack.c.bf16 %v325, %v325
        %v343 = vsel %vm280, %v341, 0
        %vm345 = vcmask 1043456
        %v347 = vsel %vm345, %v279, 0
        %349 = vmatpush.bf16.msra.mxu0 0
        %350 = vmatpush.bf16.msra.mxu0 0
        %351 = vmatpush.bf16.msra.mxu0 0
        %352 = vmatpush.bf16.msra.mxu0 0
        %353 = vmatpush.bf16.msra.mxu0 0
        %354 = vmatpush.bf16.msra.mxu0 0
        %355 = vmatpush.bf16.msra.mxu0 0
        %356 = vmatpush.bf16.msra.mxu0 %v347
        %357 = vmatmul.bf16.gmra.mxu0 %v343
        %v358 = vpop.f32.mrf.mxu0
        %v359 = vadd.f32 0.0, %v358
        %v360 = vpop.f32.mrf.mxu0
        %361 = vdwg.mxu0
        %v362 = vadd.f32 %v340, %v359
        %363 = vst.msk [vmem:[#allocation4] sm:$0xff] %vm280, %v362
        %364 = vst.msk [vmem:[#allocation2] sm:$0xff] %vm332, %v314
      $region40: #{decode.19} parent=31 // pred_fallthru
        _
      // Predicated region
      $region41: #{decode.19} parent=31 // pred_check
        %p365 = pneg %p261
      $region42: #{decode.19} parent=31 // pred_check_branch
        %367 = sbr.rel (%p365) target = $region44
      $region43: #{decode.19} parent=31 // pred_region
        %v368 = vld [vmem:[#allocation3] sm:$0xff]
        %v369 = vrcp.pop %v368
        %v370 = vld [vmem:[#allocation4] sm:$0xff]
        %372 = vset.pattern.permute.xlu0 0
        %373 = vperm.xlu0 %372, %v369
        %v374 = vpop.permute.xlu0 %373
        %v376 = vmul.f32 %v370, %v374
        %v377 = vpack.c.bf16 %v376, %v376
        %vm378 = vcmask 60416
        %379 = vst.msk [vmem:[%s259] sm:$0xf] %vm378, %v377
      $region44: #{decode.19} parent=31 // pred_fallthru
        _
      %p380 = scmp.lt.s32.totalorder %s19, 7
      %s381 = scalar_select %p380, %s19, 7
      %p382 = scmp.lt.s32.totalorder %s20, 0
      %s383 = scalar_select %p382, %s20, 0
      %s384 = sadd.s32 %s383, %s381
      %s385 = smul.addr %s384, 4
      %s386 = scalar_lea.vmem %s3, %s385
      // Predicated region
      $region45: #{decode.19} parent=31 // pred_check
        %p387 = pneg %p137
      $region46: #{decode.19} parent=31 // pred_check_branch
        %389 = sbr.rel (%p387) target = $region48
      $region47: #{decode.19} parent=31 // pred_region
        _
      $region48: #{decode.19} parent=31 // pred_fallthru
        _
    $region32: #{decode.19} parent=5 // pred_fallthru
      _
    %p390 = scmp.le.s32.totalorder 2, %s9
    // Predicated region
    $region49: #{decode.19} parent=5 // pred_check
      %p391 = pneg %p390
    $region50: #{decode.19} parent=5 // pred_check_branch
      %393 = sbr.rel (%p391) target = $region52
    $region51: #{decode.19} parent=5 // pred_region
      %s394 = ssub.s32 %s9, 2
      // Predicated region
      $region53: #{decode.19} parent=51 // pred_check
        %p395 = pneg %p143
      $region54: #{decode.19} parent=51 // pred_check_branch
        %397 = sbr.rel (%p395) target = $region56
      $region55: #{decode.19} parent=51 // pred_region
        %p398 = scmp.lt.s32.totalorder %s22, 7
        %s399 = scalar_select %p398, %s22, 7
        %p400 = scmp.lt.s32.totalorder %s23, 0
        %s401 = scalar_select %p400, %s23, 0
        %s402 = sadd.s32 %s401, %s399
        %s403 = smul.addr %s402, 4
        %s404 = scalar_lea.vmem %s3, %s403
      $region56: #{decode.19} parent=51 // pred_fallthru
        _
    $region52: #{decode.19} parent=5 // pred_fallthru
      _
  $region6: #{decode.19} parent=0 // loop_footer
    %s13 = sadd.s32 1, %s9
  $region7: #{decode.19} parent=0 // loop_footer_branch
    %8 = sbr.rel target = $region3
  $region8: #{decode.19} parent=0 // loop_exit
    _

// kernel: decode.20
$region0: #{decode.20}
  #allocation0 [shape = 'u32[]', space=smem, size = 0x4, offset = 0x4, fixed_abs, tag = 'smem constant byte address 0x4 - core index']
  #allocation1 [shape = 'u32[72,128]{1,0:T(1,128)}', space=vmem, size = 0x9000, scoped, tag = 'internal scratch']
  #allocation2 [shape = 'f32[16,32]{1,0:T(8,128)}', space=vmem, size = 0x2000, scoped, tag = 'scratch operand']
  %s0 = inlined_call_operand.vmem [shape: bf16[16,32], index: 0, kind: input, shape index: {}]
  %s1 = inlined_call_operand.vmem [shape: bf16[32,32], index: 1, kind: input, shape index: {}]
  %s2 = inlined_call_operand.vmem [shape: bf16[16,32], index: 2, kind: input, shape index: {}]
  %s3 = inlined_call_operand.vmem [shape: bf16[16,32], index: 3, kind: output, shape index: {}]
  %s4 = sld [smem:[#allocation0]]
  $region30: #{decode.20} parent=0
    _
  %s6 = ssub.s32 1, %s4
  %s7 = scalar_select 0, %s6, %s4
  // Predicated region
  $region2: #{decode.20} parent=0 // pred_check
    _
  $region3: #{decode.20} parent=0 // pred_check_branch
    %9 = sbr.rel (0) target = $region5
  $region4: #{decode.20} parent=0 // pred_region
    _
  $region5: #{decode.20} parent=0 // pred_fallthru
    _
  // Predicated region
  $region6: #{decode.20} parent=0 // pred_check
    _
  $region7: #{decode.20} parent=0 // pred_check_branch
    %11 = sbr.rel (0) target = $region9
  $region8: #{decode.20} parent=0 // pred_region
    _
  $region9: #{decode.20} parent=0 // pred_fallthru
    _
  // Predicated region
  $region10: #{decode.20} parent=0 // pred_check
    _
  $region11: #{decode.20} parent=0 // pred_check_branch
    %13 = sbr.rel (0) target = $region13
  $region12: #{decode.20} parent=0 // pred_region
    _
  $region13: #{decode.20} parent=0 // pred_fallthru
    _
  %p15 = scmp.eq.s32.totalorder 0, 0
  // Predicated region
  $region14: #{decode.20} parent=0 // pred_check
    %p16 = pneg %p15
  $region15: #{decode.20} parent=0 // pred_check_branch
    %18 = sbr.rel (%p16) target = $region17
  $region16: #{decode.20} parent=0 // pred_region
    %vm19 = vcmask 261120
    %20 = vst.msk [vmem:[#allocation2] sm:$0xff] %vm19, 0.0
    %21 = vst.msk [vmem:[#allocation2 + $0x8] sm:$0xff] %vm19, 0.0
  $region17: #{decode.20} parent=0 // pred_fallthru
    _
  %v22 = vld [vmem:[#allocation2] sm:$0xff]
  %v23 = vld [vmem:[#allocation2 + $0x8] sm:$0xff]
  %v24 = vld [vmem:[%s0] sm:$0xf]
  %v25 = vld [vmem:[%s0 + $0x4] sm:$0xf]
  %v26 = vld [vmem:[%s1] sm:$0xf]
  %v27 = vld [vmem:[%s1 + $0x4] sm:$0xf]
  %v28 = vld [vmem:[%s1 + $0x8] sm:$0xf]
  %v29 = vld [vmem:[%s1 + $0xc] sm:$0xf]
  %v32 = vunpack.c.l.b16 %v24
  %v33 = vunpack.c.l.b16 %v25
  %v34 = vpack.c.b16 %v33, %v32
  %v39 = vunpack.c.l.b16 %v26
  %v40 = vunpack.c.l.b16 %v27
  %v41 = vunpack.c.l.b16 %v28
  %v42 = vunpack.c.l.b16 %v29
  %v43 = vpack.c.b16 %v40, %v39
  %v44 = vpack.c.b16 %v42, %v41
  %vm47 = vcmask 261120
  %v49 = vsel %vm47, %v34, 0
  %51 = vmatpush.bf16.msra.mxu0 0
  %52 = vmatpush.bf16.msra.mxu0 0
  %53 = vmatpush.bf16.msra.mxu0 0
  %54 = vmatpush.bf16.msra.mxu0 0
  %55 = vmatpush.bf16.msra.mxu0 0
  %56 = vmatpush.bf16.msra.mxu0 0
  %57 = vmatpush.bf16.msra.mxu0 %v44
  %58 = vmatpush.bf16.msra.mxu0 %v43
  %59 = vmatmul.bf16.gmra.mxu0 %v49
  %v60 = vpop.f32.mrf.mxu0
  %v61 = vadd.f32 0.0, %v60
  %v62 = vpop.f32.mrf.mxu0
  %v63 = vadd.f32 0.0, %v62
  %64 = vdwg.mxu0
  %v65 = vadd.f32 %v22, %v61
  %v66 = vadd.f32 %v23, %v63
  %67 = vst.msk [vmem:[#allocation2] sm:$0xff] %vm47, %v65
  %68 = vst.msk [vmem:[#allocation2 + $0x8] sm:$0xff] %vm47, %v66
  // Predicated region
  $region18: #{decode.20} parent=0 // pred_check
    %p69 = pneg %p15
  $region19: #{decode.20} parent=0 // pred_check_branch
    %71 = sbr.rel (%p69) target = $region21
  $region20: #{decode.20} parent=0 // pred_region
    %v72 = vld [vmem:[#allocation2] sm:$0xff]
    %v73 = vld [vmem:[#allocation2 + $0x8] sm:$0xff]
    %v74 = vld [vmem:[%s2] sm:$0xf]
    %v75 = vld [vmem:[%s2 + $0x4] sm:$0xf]
    %v76 = vunpack.c.l.bf16 %v74
    %v77 = vunpack.c.l.bf16 %v75
    %v78 = vadd.f32 %v72, %v76
    %v79 = vadd.f32 %v73, %v77
    %v80 = vpack.c.bf16 %v78, %v78
    %v81 = vpack.c.bf16 %v79, %v79
    %vm82 = vcmask 257024
    %83 = vst.msk [vmem:[%s3] sm:$0xf] %vm82, %v80
    %84 = vst.msk [vmem:[%s3 + $0x4] sm:$0xf] %vm82, %v81
  $region21: #{decode.20} parent=0 // pred_fallthru
    _
  // Predicated region
  $region22: #{decode.20} parent=0 // pred_check
    _
  $region23: #{decode.20} parent=0 // pred_check_branch
    %86 = sbr.rel (0) target = $region25
  $region24: #{decode.20} parent=0 // pred_region
    _
  $region25: #{decode.20} parent=0 // pred_fallthru
    _
  // Predicated region
  $region26: #{decode.20} parent=0 // pred_check
    _
  $region27: #{decode.20} parent=0 // pred_check_branch
    %88 = sbr.rel (0) target = $region29
  $region28: #{decode.20} parent=0 // pred_region
    _
  $region29: #{decode.20} parent=0 // pred_fallthru
    _

// kernel: decode.31
$region0: #{decode.31}
  #allocation0 [shape = 'u32[]', space=smem, size = 0x4, offset = 0x4, fixed_abs, tag = 'smem constant byte address 0x4 - core index']
  #allocation1 [shape = 'u32[72,128]{1,0:T(1,128)}', space=vmem, size = 0x9000, scoped, tag = 'internal scratch']
  #allocation2 [shape = 'f32[16,64]{1,0:T(8,128)}', space=vmem, size = 0x2000, scoped, tag = 'scratch operand']
  %s0 = inlined_call_operand.vmem [shape: bf16[16,32], index: 0, kind: input, shape index: {}]
  %s1 = inlined_call_operand.vmem [shape: bf16[32,64], index: 1, kind: input, shape index: {}]
  %s2 = inlined_call_operand.hbm [shape: f32[16,64], index: 2, kind: output, shape index: {}]
  %s3 = sld [smem:[#allocation0]]
  $region26: #{decode.31} parent=0
    _
  %s5 = ssub.s32 1, %s3
  %s6 = scalar_select 0, %s5, %s3
  $region1: #{decode.31} parent=0
    #allocation3 [shape = 'u8[8192]{0}', space=vmem, size = 0x2000, scoped, tag = 'output window, operand 0, single buffered']
    #allocation4 [shape = 's32[1]{0}', space=sflag, size = 0x4, scoped, tag = 'scoped memory for decode.31']
    %7 = vsyncpa [#allocation4], 0
    // Predicated region
    $region2: #{decode.31} parent=1 // pred_check
      _
    $region3: #{decode.31} parent=1 // pred_check_branch
      %9 = sbr.rel (0) target = $region5
    $region4: #{decode.31} parent=1 // pred_region
      _
    $region5: #{decode.31} parent=1 // pred_fallthru
      _
    // Predicated region
    $region6: #{decode.31} parent=1 // pred_check
      _
    $region7: #{decode.31} parent=1 // pred_check_branch
      %11 = sbr.rel (0) target = $region9
    $region8: #{decode.31} parent=1 // pred_region
      _
    $region9: #{decode.31} parent=1 // pred_fallthru
      _
    %p13 = scmp.eq.s32.totalorder 0, 0
    // Predicated region
    $region10: #{decode.31} parent=1 // pred_check
      %p14 = pneg %p13
    $region11: #{decode.31} parent=1 // pred_check_branch
      %16 = sbr.rel (%p14) target = $region13
    $region12: #{decode.31} parent=1 // pred_region
      %vm17 = vcmask 523264
      %18 = vst.msk [vmem:[#allocation2] sm:$0xff] %vm17, 0.0
      %19 = vst.msk [vmem:[#allocation2 + $0x8] sm:$0xff] %vm17, 0.0
    $region13: #{decode.31} parent=1 // pred_fallthru
      _
    %v20 = vld [vmem:[#allocation2] sm:$0xff]
    %v21 = vld [vmem:[#allocation2 + $0x8] sm:$0xff]
    %v22 = vld [vmem:[%s0] sm:$0xf]
    %v23 = vld [vmem:[%s0 + $0x4] sm:$0xf]
    %v24 = vld [vmem:[%s1] sm:$0xf]
    %v25 = vld [vmem:[%s1 + $0x4] sm:$0xf]
    %v26 = vld [vmem:[%s1 + $0x8] sm:$0xf]
    %v27 = vld [vmem:[%s1 + $0xc] sm:$0xf]
    %v30 = vunpack.c.l.b16 %v22
    %v31 = vunpack.c.l.b16 %v23
    %v32 = vpack.c.b16 %v31, %v30
    %v37 = vunpack.c.l.b16 %v24
    %v38 = vunpack.c.l.b16 %v25
    %v39 = vunpack.c.l.b16 %v26
    %v40 = vunpack.c.l.b16 %v27
    %v41 = vpack.c.b16 %v38, %v37
    %v42 = vpack.c.b16 %v40, %v39
    %vm45 = vcmask 261120
    %v47 = vsel %vm45, %v32, 0
    %49 = vmatpush.bf16.msra.mxu0 0
    %50 = vmatpush.bf16.msra.mxu0 0
    %51 = vmatpush.bf16.msra.mxu0 0
    %52 = vmatpush.bf16.msra.mxu0 0
    %53 = vmatpush.bf16.msra.mxu0 0
    %54 = vmatpush.bf16.msra.mxu0 0
    %55 = vmatpush.bf16.msra.mxu0 %v42
    %56 = vmatpush.bf16.msra.mxu0 %v41
    %57 = vmatmul.bf16.gmra.mxu0 %v47
    %v58 = vpop.f32.mrf.mxu0
    %v59 = vadd.f32 0.0, %v58
    %v60 = vpop.f32.mrf.mxu0
    %v61 = vadd.f32 0.0, %v60
    %62 = vdwg.mxu0
    %v63 = vadd.f32 %v20, %v59
    %v64 = vadd.f32 %v21, %v61
    %vm65 = vcmask 523264
    %66 = vst.msk [vmem:[#allocation2] sm:$0xff] %vm65, %v63
    %67 = vst.msk [vmem:[#allocation2 + $0x8] sm:$0xff] %vm65, %v64
    // Predicated region
    $region14: #{decode.31} parent=1 // pred_check
      %p68 = pneg %p13
    $region15: #{decode.31} parent=1 // pred_check_branch
      %70 = sbr.rel (%p68) target = $region17
    $region16: #{decode.31} parent=1 // pred_region
      %v71 = vld [vmem:[#allocation2] sm:$0xff]
      %v72 = vld [vmem:[#allocation2 + $0x8] sm:$0xff]
      %73 = vst.msk [vmem:[#allocation3] sm:$0xff] %vm65, %v71
      %74 = vst.msk [vmem:[#allocation3 + $0x8] sm:$0xff] %vm65, %v72
    $region17: #{decode.31} parent=1 // pred_fallthru
      _
    // Predicated region
    $region18: #{decode.31} parent=1 // pred_check
      _
    $region19: #{decode.31} parent=1 // pred_check_branch
      %76 = sbr.rel (0) target = $region21
    $region20: #{decode.31} parent=1 // pred_region
      %78 = vsyncadd [#allocation4], 0
      %s79 = sshll.u32 [#allocation3], 4
      %s80 = int_to_ptr.vmem [resolvable:$true] %s79
      %s81 = sshll.u32 %s2, 4
      %s82 = int_to_ptr.hbm [resolvable:$true] %s81
      %87 = dma.vmem_to_hbm [thread:$0]  %s80, 256, %s82, [#allocation4], 128, 128, 8
    $region21: #{decode.31} parent=1 // pred_fallthru
      _
    // Predicated region
    $region22: #{decode.31} parent=1 // pred_check
      _
    $region23: #{decode.31} parent=1 // pred_check_branch
      %89 = sbr.rel (0) target = $region25
    $region24: #{decode.31} parent=1 // pred_region
      %91 = dma.done [#allocation4], 256
    $region25: #{decode.31} parent=1 // pred_fallthru
      _
    %92 = vsyncpa [#allocation4], 1

// kernel: decode.22
$region0: #{decode.22}
  #allocation0 [shape = 'u32[]', space=smem, size = 0x4, offset = 0x4, fixed_abs, tag = 'smem constant byte address 0x4 - core index']
  #allocation1 [shape = 'u32[72,128]{1,0:T(1,128)}', space=vmem, size = 0x9000, scoped, tag = 'internal scratch']
  #allocation2 [shape = 'f32[16,32]{1,0:T(8,128)}', space=vmem, size = 0x2000, scoped, tag = 'scratch operand']
  %s0 = inlined_call_operand.vmem [shape: bf16[16,32], index: 0, kind: input, shape index: {}]
  %s1 = inlined_call_operand.vmem [shape: bf16[32,96], index: 1, kind: input, shape index: {}]
  %s2 = inlined_call_operand.vmem [shape: bf16[32,96], index: 2, kind: input, shape index: {}]
  %s3 = inlined_call_operand.vmem [shape: bf16[96,32], index: 3, kind: input, shape index: {}]
  %s4 = inlined_call_operand.vmem [shape: bf16[16,32], index: 4, kind: input, shape index: {}]
  %s5 = inlined_call_operand.vmem [shape: bf16[16,32], index: 5, kind: output, shape index: {}]
  %s6 = sld [smem:[#allocation0]]
  $region38: #{decode.22} parent=0
    _
  %s8 = ssub.s32 1, %s6
  %s9 = scalar_select 0, %s8, %s6
  // Predicated region
  $region2: #{decode.22} parent=0 // pred_check
    _
  $region3: #{decode.22} parent=0 // pred_check_branch
    %11 = sbr.rel (0) target = $region5
  $region4: #{decode.22} parent=0 // pred_region
    _
  $region5: #{decode.22} parent=0 // pred_fallthru
    _
  // Predicated region
  $region6: #{decode.22} parent=0 // pred_check
    _
  $region7: #{decode.22} parent=0 // pred_check_branch
    %13 = sbr.rel (0) target = $region9
  $region8: #{decode.22} parent=0 // pred_region
    _
  $region9: #{decode.22} parent=0 // pred_fallthru
    _
  // Predicated region
  $region10: #{decode.22} parent=0 // pred_check
    _
  $region11: #{decode.22} parent=0 // pred_check_branch
    %15 = sbr.rel (0) target = $region13
  $region12: #{decode.22} parent=0 // pred_region
    _
  $region13: #{decode.22} parent=0 // pred_fallthru
    _
  // Predicated region
  $region14: #{decode.22} parent=0 // pred_check
    _
  $region15: #{decode.22} parent=0 // pred_check_branch
    %17 = sbr.rel (0) target = $region17
  $region16: #{decode.22} parent=0 // pred_region
    _
  $region17: #{decode.22} parent=0 // pred_fallthru
    _
  // Predicated region
  $region18: #{decode.22} parent=0 // pred_check
    _
  $region19: #{decode.22} parent=0 // pred_check_branch
    %19 = sbr.rel (0) target = $region21
  $region20: #{decode.22} parent=0 // pred_region
    _
  $region21: #{decode.22} parent=0 // pred_fallthru
    _
  %p21 = scmp.eq.s32.totalorder 0, 0
  // Predicated region
  $region22: #{decode.22} parent=0 // pred_check
    %p22 = pneg %p21
  $region23: #{decode.22} parent=0 // pred_check_branch
    %24 = sbr.rel (%p22) target = $region25
  $region24: #{decode.22} parent=0 // pred_region
    %vm25 = vcmask 261120
    %26 = vst.msk [vmem:[#allocation2] sm:$0xff] %vm25, 0.0
    %27 = vst.msk [vmem:[#allocation2 + $0x8] sm:$0xff] %vm25, 0.0
  $region25: #{decode.22} parent=0 // pred_fallthru
    _
  %v28 = vld [vmem:[%s0] sm:$0xf]
  %v29 = vld [vmem:[%s0 + $0x4] sm:$0xf]
  %v30 = vld [vmem:[%s1] sm:$0xf]
  %v31 = vld [vmem:[%s1 + $0x4] sm:$0xf]
  %v32 = vld [vmem:[%s1 + $0x8] sm:$0xf]
  %v33 = vld [vmem:[%s1 + $0xc] sm:$0xf]
  %v36 = vunpack.c.l.b16 %v28
  %v37 = vunpack.c.l.b16 %v29
  %v38 = vpack.c.b16 %v37, %v36
  %v43 = vunpack.c.l.b16 %v30
  %v44 = vunpack.c.l.b16 %v31
  %v45 = vunpack.c.l.b16 %v32
  %v46 = vunpack.c.l.b16 %v33
  %v47 = vpack.c.b16 %v44, %v43
  %v48 = vpack.c.b16 %v46, %v45
  %vm51 = vcmask 261120
  %v53 = vsel %vm51, %v38, 0
  %55 = vmatpush.bf16.msra.mxu0 0
  %56 = vmatpush.bf16.msra.mxu0 0
  %57 = vmatpush.bf16.msra.mxu0 0
  %58 = vmatpush.bf16.msra.mxu0 0
  %59 = vmatpush.bf16.msra.mxu0 0
  %60 = vmatpush.bf16.msra.mxu0 0
  %61 = vmatpush.bf16.msra.mxu0 %v48
  %62 = vmatpush.bf16.msra.mxu0 %v47
  %63 = vmatmul.bf16.gmra.mxu0 %v53
  %v64 = vpop.f32.mrf.mxu0
  %v65 = vadd.f32 0.0, %v64
  %v66 = vpop.f32.mrf.mxu0
  %v67 = vadd.f32 0.0, %v66
  %68 = vdwg.mxu0
  %v69 = vld [vmem:[%s2] sm:$0xf]
  %v70 = vld [vmem:[%s2 + $0x4] sm:$0xf]
  %v71 = vld [vmem:[%s2 + $0x8] sm:$0xf]
  %v72 = vld [vmem:[%s2 + $0xc] sm:$0xf]
  %v77 = vunpack.c.l.b16 %v69
  %v78 = vunpack.c.l.b16 %v70
  %v79 = vunpack.c.l.b16 %v71
  %v80 = vunpack.c.l.b16 %v72
  %v81 = vpack.c.b16 %v78, %v77
  %v82 = vpack.c.b16 %v80, %v79
  %85 = vmatpush.bf16.msra.mxu0 0
  %86 = vmatpush.bf16.msra.mxu0 0
  %87 = vmatpush.bf16.msra.mxu0 0
  %88 = vmatpush.bf16.msra.mxu0 0
  %89 = vmatpush.bf16.msra.mxu0 0
  %90 = vmatpush.bf16.msra.mxu0 0
  %91 = vmatpush.bf16.msra.mxu0 %v82
  %92 = vmatpush.bf16.msra.mxu0 %v81
  %93 = vmatmul.bf16.gmra.mxu0 %v53
  %v94 = vpop.f32.mrf.mxu0
  %v95 = vadd.f32 0.0, %v94
  %v96 = vpop.f32.mrf.mxu0
  %v97 = vadd.f32 0.0, %v96
  %98 = vdwg.mxu0
  %v99 = vxor.u32 %v65, 2147483648
  %v100 = vxor.u32 %v67, 2147483648
  %v101 = vmul.f32 %v99, 1.442695
  %v102 = vpow.pop %v101
  %v103 = vmul.f32 %v100, 1.442695
  %v104 = vpow.pop %v103
  %v105 = vadd.f32 %v102, 1.0
  %v106 = vadd.f32 %v104, 1.0
  %v107 = vrcp.pop %v105
  %v108 = vmul.f32 %v105, %v107
  %v109 = vsub.f32 1.0, %v108
  %v110 = vmul.f32 %v107, %v109
  %v111 = vadd.f32 %v107, %v110
  %vm112 = vweird.f32 %v105
  %vm113 = vweird.f32 %v107
  %vm114 = vmor %vm112, %vm113
  %v115 = vsel %vm114, %v107, %v111
  %v116 = vand.u32 2147483647, %v105
  %vm117 = vcmp.eq.f32.partialorder %v116, 8.507059e+37
  %v118 = vand.u32 %v105, 2147483648
  %v119 = vor.u32 1.1754944e-38, %v118
  %v120 = vsel %vm117, %v119, %v115
  %v121 = vmul.f32 1.0, %v120
  %v122 = vrcp.pop %v106
  %v123 = vmul.f32 %v106, %v122
  %v124 = vsub.f32 1.0, %v123
  %v125 = vmul.f32 %v122, %v124
  %v126 = vadd.f32 %v122, %v125
  %vm127 = vweird.f32 %v106
  %vm128 = vweird.f32 %v122
  %vm129 = vmor %vm127, %vm128
  %v130 = vsel %vm129, %v122, %v126
  %v131 = vand.u32 2147483647, %v106
  %vm132 = vcmp.eq.f32.partialorder %v131, 8.507059e+37
  %v133 = vand.u32 %v106, 2147483648
  %v134 = vor.u32 1.1754944e-38, %v133
  %v135 = vsel %vm132, %v134, %v130
  %v136 = vmul.f32 1.0, %v135
  %v137 = vmul.f32 %v65, %v121
  %v138 = vmul.f32 %v67, %v136
  %v139 = vmul.f32 %v137, %v95
  %v140 = vmul.f32 %v138, %v97
  %v141 = vld [vmem:[#allocation2] sm:$0xff]
  %v142 = vld [vmem:[#allocation2 + $0x8] sm:$0xff]
  %v143 = vpack.c.bf16 %v140, %v139
  %v144 = vld [vmem:[%s3] sm:$0xf]
  %v145 = vld [vmem:[%s3 + $0x4] sm:$0xf]
  %v146 = vld [vmem:[%s3 + $0x8] sm:$0xf]
  %v147 = vld [vmem:[%s3 + $0xc] sm:$0xf]
  %v148 = vld [vmem:[%s3 + $0x10] sm:$0xf]
  %v149 = vld [vmem:[%s3 + $0x14] sm:$0xf]
  %v150 = vld [vmem:[%s3 + $0x18] sm:$0xf]
  %v151 = vld [vmem:[%s3 + $0x1c] sm:$0xf]
  %v152 = vld [vmem:[%s3 + $0x20] sm:$0xf]
  %v153 = vld [vmem:[%s3 + $0x24] sm:$0xf]
  %v154 = vld [vmem:[%s3 + $0x28] sm:$0xf]
  %v155 = vld [vmem:[%s3 + $0x2c] sm:$0xf]
  %v168 = vunpack.c.l.b16 %v144
  %v169 = vunpack.c.l.b16 %v145
  %v170 = vunpack.c.l.b16 %v146
  %v171 = vunpack.c.l.b16 %v147
  %v172 = vunpack.c.l.b16 %v148
  %v173 = vunpack.c.l.b16 %v149
  %v174 = vunpack.c.l.b16 %v150
  %v175 = vunpack.c.l.b16 %v151
  %v176 = vunpack.c.l.b16 %v152
  %v177 = vunpack.c.l.b16 %v153
  %v178 = vunpack.c.l.b16 %v154
  %v179 = vunpack.c.l.b16 %v155
  %v180 = vpack.c.b16 %v169, %v168
  %v181 = vpack.c.b16 %v171, %v170
  %v182 = vpack.c.b16 %v173, %v172
  %v183 = vpack.c.b16 %v175, %v174
  %v184 = vpack.c.b16 %v177, %v176
  %v185 = vpack.c.b16 %v179, %v178
  %vm192 = vcmask 785408
  %v194 = vsel %vm192, %v143, 0
  %196 = vmatpush.bf16.msra.mxu0 0
  %197 = vmatpush.bf16.msra.mxu0 0
  %198 = vmatpush.bf16.msra.mxu0 %v185
  %199 = vmatpush.bf16.msra.mxu0 %v184
  %200 = vmatpush.bf16.msra.mxu0 %v183
  %201 = vmatpush.bf16.msra.mxu0 %v182
  %202 = vmatpush.bf16.msra.mxu0 %v181
  %203 = vmatpush.bf16.msra.mxu0 %v180
  %204 = vmatmul.bf16.gmra.mxu0 %v194
  %v205 = vpop.f32.mrf.mxu0
  %v206 = vadd.f32 0.0, %v205
  %v207 = vpop.f32.mrf.mxu0
  %v208 = vadd.f32 0.0, %v207
  %209 = vdwg.mxu0
  %v210 = vadd.f32 %v141, %v206
  %v211 = vadd.f32 %v142, %v208
  %212 = vst.msk [vmem:[#allocation2] sm:$0xff] %vm51, %v210
  %213 = vst.msk [vmem:[#allocation2 + $0x8] sm:$0xff] %vm51, %v211
  // Predicated region
  $region26: #{decode.22} parent=0 // pred_check
    %p214 = pneg %p21
  $region27: #{decode.22} parent=0 // pred_check_branch
    %216 = sbr.rel (%p214) target = $region29
  $region28: #{decode.22} parent=0 // pred_region
    %v217 = vld [vmem:[#allocation2] sm:$0xff]
    %v218 = vld [vmem:[#allocation2 + $0x8] sm:$0xff]
    %v219 = vld [vmem:[%s4] sm:$0xf]
    %v220 = vld [vmem:[%s4 + $0x4] sm:$0xf]
    %v221 = vunpack.c.l.bf16 %v219
    %v222 = vunpack.c.l.bf16 %v220
    %v223 = vadd.f32 %v217, %v221
    %v224 = vadd.f32 %v218, %v222
    %v225 = vpack.c.bf16 %v223, %v223
    %v226 = vpack.c.bf16 %v224, %v224
    %vm227 = vcmask 257024
    %228 = vst.msk [vmem:[%s5] sm:$0xf] %vm227, %v225
    %229 = vst.msk [vmem:[%s5 + $0x4] sm:$0xf] %vm227, %v226
  $region29: #{decode.22} parent=0 // pred_fallthru
    _
  // Predicated region
  $region30: #{decode.22} parent=0 // pred_check
    _
  $region31: #{decode.22} parent=0 // pred_check_branch
    %231 = sbr.rel (0) target = $region33
  $region32: #{decode.22} parent=0 // pred_region
    _
  $region33: #{decode.22} parent=0 // pred_fallthru
    _
  // Predicated region
  $region34: #{decode.22} parent=0 // pred_check
    _
  $region35: #{decode.22} parent=0 // pred_check_branch
    %233 = sbr.rel (0) target = $region37
  $region36: #{decode.22} parent=0 // pred_region
    _
  $region37: #{decode.22} parent=0 // pred_fallthru
    _

</llo_original>
